<compile_context>
chip_gen: v7x
topology: tpu7x:2x2x1
jax: 0.10.0
libtpu: 0.0.40
codegen_flags: <defaults>
</compile_context>

<pallas_src>
import functools

import jax
import jax.numpy as jnp
from jax.experimental import pallas as pl
from jax.experimental.pallas import tpu as pltpu

_LANE = 128


def _round_up(a, b):
    return (a + b - 1) // b * b


def _choose_tiles(M, K_eff, cout_mm, cout, in_isz, out_isz, budget):
    """Largest (M_TILE, K_TILE) whose double-buffered working set fits `budget` bytes."""
    m_cap = _round_up(M, 16)
    k_cands_split = [t for t in (4096, 2048, 1024, 512, 256, 128) if t < K_eff]
    for m_cand in (2048, 1024, 512, 256, 128):
        m_tile = min(m_cand, m_cap)
        for k_tile in [K_eff] + k_cands_split:
            usage = (2 * m_tile * k_tile * in_isz        # patch block, double buffered
                     + 2 * k_tile * cout_mm * in_isz     # weight block, double buffered
                     + 2 * cout * m_tile * out_isz       # output block, double buffered
                     + m_tile * cout_mm * 4              # f32 accumulator scratch
                     + cout_mm * 4)                      # bias
            if usage <= budget:
                return m_tile, k_tile
    return min(128, m_cap), min(K_eff, 128)


def _conv3d_mm_kernel(p_ref, w_ref, b_ref, o_ref, acc_ref, *, cout):
    # p_ref:  (1, M_TILE, K_TILE)     im2col patches for one (batch, M-tile, K-tile)
    # w_ref:  (K_TILE, COUT_MM)       padded weight tile (resident when n_k == 1)
    # b_ref:  (Cout, 1)               bias (f32, unpadded)
    # o_ref:  (1, Cout, M_TILE)       unpadded-channel, lane-dense (M on lanes) output
    # acc_ref:(M_TILE, COUT_MM) f32   accumulator scratch across the K grid axis
    kk = pl.program_id(2)

    @pl.when(kk == 0)
    def _init():
        acc_ref[...] = jnp.zeros_like(acc_ref)

    acc_ref[...] += jax.lax.dot_general(
        p_ref[0], w_ref[...],
        dimension_numbers=(((1,), (0,)), ((), ())),
        preferred_element_type=jnp.float32)              # single MXU matmul per step

    @pl.when(kk == pl.num_programs(2) - 1)
    def _finalize():
        acc_t = jnp.transpose(acc_ref[...], (1, 0))      # (COUT_MM, M_TILE), XLU slot
        o_ref[0] = (acc_t[:cout, :] + b_ref[...]).astype(o_ref.dtype)


def single_conv3d_block(x_ncdhw, weight, bias, kernel_size, *,
                        compute_dtype=jnp.float32):
    """Conv3d(stride=1, padding=(k-1)//2) forward.

    x_ncdhw: (N, Cin, D, H, W)   weight: (Cout, Cin, k, k, k)   bias: (Cout,)
    Returns (N, Cout, Do, Ho, Wo), identical semantics to torch's nn.Conv3d.
    """
    k = int(kernel_size)
    pad = (k - 1) // 2
    N, Cin, D, H, W = x_ncdhw.shape
    Cout = int(weight.shape[0])
    Do, Ho, Wo = D + 2 * pad - k + 1, H + 2 * pad - k + 1, W + 2 * pad - k + 1
    M = Do * Ho * Wo
    K_eff = Cin * k ** 3
    COUT_MM = _round_up(Cout, _LANE)              # matmul width only; never hits HBM

    in_isz = jnp.dtype(compute_dtype).itemsize
    out_isz = jnp.dtype(x_ncdhw.dtype).itemsize

    # ---- generation-aware tile budget (v7x has only 64 MiB VMEM per core) ----
    try:
        vmem_cap = int(getattr(pltpu.get_tpu_info(), "vmem_capacity_bytes", 64 << 20))
    except Exception:
        vmem_cap = 64 << 20
    budget = max(16 << 20, int(vmem_cap * 0.45))

    M_TILE, K_TILE = _choose_tiles(M, K_eff, COUT_MM, Cout, in_isz, out_isz, budget)
    M_padded = _round_up(M, M_TILE)
    # v7x megacore: make sure there are >= 2 parallel grid steps when possible.
    if N * (M_padded // M_TILE) < 2 and M_TILE % 256 == 0:
        M_TILE //= 2
        M_padded = _round_up(M, M_TILE)
    K_padded = _round_up(K_eff, K_TILE)           # == K_eff unless the K axis is split
    n_m = M_padded // M_TILE
    n_k = K_padded // K_TILE

    # ---- glue (plain JAX, fused by XLA): cast once, channels-last, pad, im2col ----
    x_cl = jnp.transpose(x_ncdhw.astype(compute_dtype), (0, 2, 3, 4, 1))   # (N,D,H,W,Cin)
    x_p = jnp.pad(x_cl, ((0, 0), (pad, pad), (pad, pad), (pad, pad), (0, 0)))

    # tap order (kd, kh, kw, cin) along the last axis -> matches weight reshape below
    taps = [x_p[:, kd:kd + Do, kh:kh + Ho, kw:kw + Wo, :]
            for kd in range(k) for kh in range(k) for kw in range(k)]
    patches = jnp.concatenate(taps, axis=-1).reshape(N, M, K_eff)
    if M_padded != M or K_padded != K_eff:
        patches = jnp.pad(patches, ((0, 0), (0, M_padded - M), (0, K_padded - K_eff)))

    # (Cout,Cin,kd,kh,kw) -> (kd,kh,kw,Cin,Cout) -> (K_eff,Cout) -> (K_padded,COUT_MM)
    w2d = jnp.transpose(weight, (2, 3, 4, 1, 0)).reshape(K_eff, Cout).astype(compute_dtype)
    w2d = jnp.pad(w2d, ((0, K_padded - K_eff), (0, COUT_MM - Cout)))
    b2d = bias.astype(jnp.float32).reshape(Cout, 1)

    vmem_usage = (2 * M_TILE * K_TILE * in_isz + 2 * K_TILE * COUT_MM * in_isz
                  + 2 * Cout * M_TILE * out_isz + M_TILE * COUT_MM * 4 + COUT_MM * 4)
    vmem_limit = int(min(vmem_cap, max(vmem_usage + (8 << 20), 32 << 20)))

    cost = pl.CostEstimate(
        flops=2 * N * M * K_eff * Cout,
        transcendentals=0,
        bytes_accessed=(N * M_padded * K_padded * in_isz
                        + K_padded * COUT_MM * in_isz
                        + Cout * 4
                        + N * Cout * M_padded * out_isz))

    kernel = functools.partial(_conv3d_mm_kernel, cout=Cout)

    out3 = pl.pallas_call(
        kernel,
        out_shape=jax.ShapeDtypeStruct((N, Cout, M_padded), x_ncdhw.dtype),
        grid_spec=pltpu.PrefetchScalarGridSpec(
            num_scalar_prefetch=0,
            grid=(N, n_m, n_k),
            in_specs=[
                pl.BlockSpec((1, M_TILE, K_TILE), lambda n, m, kk: (n, m, kk)),
                pl.BlockSpec((K_TILE, COUT_MM), lambda n, m, kk: (kk, 0)),
                pl.BlockSpec((Cout, 1), lambda n, m, kk: (0, 0)),
            ],
            out_specs=pl.BlockSpec((1, Cout, M_TILE), lambda n, m, kk: (n, 0, m)),
            scratch_shapes=[pltpu.VMEM((M_TILE, COUT_MM), jnp.float32)],
        ),
        compiler_params=pltpu.CompilerParams(
            dimension_semantics=("parallel", "parallel", "arbitrary"),
            vmem_limit_bytes=vmem_limit),
        cost_estimate=cost,
    )(patches, w2d, b2d)

    out = out3[:, :, :M] if M_padded != M else out3
    return out.reshape(N, Cout, Do, Ho, Wo)       # free reshape: NCDHW, no transpose


if __name__ == "__main__":
    key = jax.random.PRNGKey(0)
    k_x, k_w, k_b, k_w2, k_b2 = jax.random.split(key, 5)

    N, Cin, Cout, S = 2, 4, 8, 8
    x = jax.random.normal(k_x, (N, Cin, S, S, S), dtype=jnp.float32)

    def torch_like_init(kw_key, kb_key, cout, cin, k):
        fan_in = cin * k ** 3
        bound = 1.0 / (fan_in ** 0.5)
        w = jax.random.uniform(kw_key, (cout, cin, k, k, k), jnp.float32, -bound, bound)
        b = jax.random.uniform(kb_key, (cout,), jnp.float32, -bound, bound)
        return w, b

    def conv_ref(x_, w_, b_, k):
        pad = (k - 1) // 2
        return jax.lax.conv_general_dilated(
            x_, w_, window_strides=(1, 1, 1),
            padding=[(pad, pad)] * 3,
            dimension_numbers=("NCDHW", "OIDHW", "NCDHW"),
        ) + b_.reshape(1, -1, 1, 1, 1)

    # --- kernel_size=3, fp32 (matches torch Conv3d semantics) ---
    K = 3
    w3, b3 = torch_like_init(k_w, k_b, Cout, Cin, K)
    fwd_f32 = jax.jit(functools.partial(single_conv3d_block, kernel_size=K))
    out = jax.block_until_ready(fwd_f32(x, w3, b3))
    ref = conv_ref(x, w3, b3, K)
    assert out.shape == ref.shape, (out.shape, ref.shape)
    assert jnp.allclose(out, ref, atol=1e-3, rtol=1e-3)

    # --- kernel_size=3, bf16 compute path (f32 accumulation on the MXU) ---
    fwd_bf16 = jax.jit(functools.partial(single_conv3d_block, kernel_size=K,
                                         compute_dtype=jnp.bfloat16))
    out_bf = jax.block_until_ready(fwd_bf16(x, w3, b3))
    assert jnp.allclose(out_bf, ref, atol=3e-2, rtol=3e-2)

    # --- kernel_size=2 (the 2x2x2 case from the module docstring), fp32 ---
    K2 = 2
    w2, b2 = torch_like_init(k_w2, k_b2, Cout, Cin, K2)
    fwd2 = jax.jit(functools.partial(single_conv3d_block, kernel_size=K2))
    out2 = jax.block_until_ready(fwd2(x, w2, b2))
    ref2 = conv_ref(x, w2, b2, K2)
    assert out2.shape == ref2.shape, (out2.shape, ref2.shape)
    assert jnp.allclose(out2, ref2, atol=1e-3, rtol=1e-3)

    print("KERNEL_OK")
</pallas_src>

<mosaic_0001>
module attributes {stable_mosaic.version = 11 : i64} {
  func.func @_conv3d_mm_kernel(%arg0: i32, %arg1: i32, %arg2: i32, %arg3: memref<1x512x108xf32, #tpu.memory_space<vmem>>, %arg4: memref<108x128xf32, #tpu.memory_space<vmem>>, %arg5: memref<8x1xf32, #tpu.memory_space<vmem>>, %arg6: memref<1x8x512xf32, #tpu.memory_space<vmem>>, %arg7: memref<512x128xf32, #tpu.memory_space<vmem>>) attributes {dimension_semantics = [#tpu.dimension_semantics<parallel>, #tpu.dimension_semantics<parallel>, #tpu.dimension_semantics<arbitrary>], iteration_bounds = array<i64: 2, 1, 1>, scalar_prefetch = 0 : i64, scratch_operands = 1 : i64, tpu.core_type = #tpu.core_type<tc>, window_params = [{transform_indices = @transform_0, window_bounds = array<i64: 1, 512, 108>}, {transform_indices = @transform_1, window_bounds = array<i64: 108, 128>}, {pipeline_mode = #tpu.pipeline_mode<synchronous>, transform_indices = @transform_2, window_bounds = array<i64: 8, 1>}, {transform_indices = @transform_3, window_bounds = array<i64: 1, 8, 512>}]} {
    %c0_i32 = arith.constant 0 : i32
    %0 = arith.cmpi eq, %arg2, %c0_i32 : i32
    %1 = arith.extui %0 : i1 to i32
    %c0_i32_0 = arith.constant 0 : i32
    %2 = arith.cmpi ne, %1, %c0_i32_0 : i32
    scf.if %2 {
      %cst_11 = arith.constant 0.000000e+00 : f32
      %13 = vector.broadcast %cst_11 : f32 to vector<512x128xf32>
      %c0_12 = arith.constant 0 : index
      %c0_13 = arith.constant 0 : index
      %14 = vector.load %arg7[%c0_12, %c0_13] : memref<512x128xf32, #tpu.memory_space<vmem>>, vector<512x128xf32>
      tpu.vector_store %arg7[%c0_12, %c0_13], %13 {strides = array<i32>} : memref<512x128xf32, #tpu.memory_space<vmem>>, vector<512x128xf32>,
    } else {
    }
    %c0 = arith.constant 0 : index
    %c0_1 = arith.constant 0 : index
    %3 = vector.load %arg7[%c0, %c0_1] : memref<512x128xf32, #tpu.memory_space<vmem>>, vector<512x128xf32>
    %c0_2 = arith.constant 0 : index
    %c0_3 = arith.constant 0 : index
    %c0_4 = arith.constant 0 : index
    %4 = vector.load %arg3[%c0_2, %c0_3, %c0_4] : memref<1x512x108xf32, #tpu.memory_space<vmem>>, vector<1x512x108xf32>
    %5 = vector.shape_cast %4 : vector<1x512x108xf32> to vector<512x108xf32>
    %c0_5 = arith.constant 0 : index
    %c0_6 = arith.constant 0 : index
    %6 = vector.load %arg4[%c0_5, %c0_6] : memref<108x128xf32, #tpu.memory_space<vmem>>, vector<108x128xf32>
    %cst = arith.constant dense<0.000000e+00> : vector<512x128xf32>
    %7 = tpu.matmul %5, %6, %cst {dimension_numbers = #tpu.dot_dimension_numbers<[1], [0], [0], [1], [0, 0, 1, 1], [], []>} : vector<512x108xf32>, vector<108x128xf32>, vector<512x128xf32> -> vector<512x128xf32>
    %8 = arith.addf %3, %7 : vector<512x128xf32>
    %c0_7 = arith.constant 0 : index
    %c0_8 = arith.constant 0 : index
    %9 = vector.load %arg7[%c0_7, %c0_8] : memref<512x128xf32, #tpu.memory_space<vmem>>, vector<512x128xf32>
    tpu.vector_store %arg7[%c0_7, %c0_8], %8 {strides = array<i32>} : memref<512x128xf32, #tpu.memory_space<vmem>>, vector<512x128xf32>,
    %c0_i32_9 = arith.constant 0 : i32
    %10 = arith.cmpi eq, %arg2, %c0_i32_9 : i32
    %11 = arith.extui %10 : i1 to i32
    %c0_i32_10 = arith.constant 0 : i32
    %12 = arith.cmpi ne, %11, %c0_i32_10 : i32
    scf.if %12 {
      %c0_11 = arith.constant 0 : index
      %c0_12 = arith.constant 0 : index
      %13 = vector.load %arg7[%c0_11, %c0_12] : memref<512x128xf32, #tpu.memory_space<vmem>>, vector<512x128xf32>
      %14 = tpu.transpose %13, [1, 0] : vector<512x128xf32> -> vector<128x512xf32>
      %15 = vector.extract_strided_slice %14 {offsets = [0, 0], sizes = [8, 512], strides = [1, 1]} : vector<128x512xf32> to vector<8x512xf32>
      %c0_13 = arith.constant 0 : index
      %c0_14 = arith.constant 0 : index
      %16 = vector.load %arg5[%c0_13, %c0_14] : memref<8x1xf32, #tpu.memory_space<vmem>>, vector<8x1xf32>
      %17 = vector.broadcast %16 : vector<8x1xf32> to vector<8x512xf32>
      %18 = arith.addf %15, %17 : vector<8x512xf32>
      %c0_15 = arith.constant 0 : index
      %c0_16 = arith.constant 0 : index
      %c0_17 = arith.constant 0 : index
      %19 = vector.load %arg6[%c0_15, %c0_16, %c0_17] : memref<1x8x512xf32, #tpu.memory_space<vmem>>, vector<1x8x512xf32>
      %20 = vector.shape_cast %19 : vector<1x8x512xf32> to vector<8x512xf32>
      %21 = vector.shape_cast %18 : vector<8x512xf32> to vector<1x8x512xf32>
      tpu.vector_store %arg6[%c0_15, %c0_16, %c0_17], %21 {strides = array<i32>} : memref<1x8x512xf32, #tpu.memory_space<vmem>>, vector<1x8x512xf32>,
    } else {
    }
    return
  }
  func.func @transform_0(%arg0: i32, %arg1: i32, %arg2: i32) -> (i32, i32, i32) {
    %c0_i32 = arith.constant 0 : i32
    return %arg0, %arg1, %arg2 : i32, i32, i32
  }
  func.func @transform_1(%arg0: i32, %arg1: i32, %arg2: i32) -> (i32, i32) {
    %c0_i32 = arith.constant 0 : i32
    %c0_i32_0 = arith.constant 0 : i32
    return %arg2, %c0_i32 : i32, i32
  }
  func.func @transform_2(%arg0: i32, %arg1: i32, %arg2: i32) -> (i32, i32) {
    %c0_i32 = arith.constant 0 : i32
    %c0_i32_0 = arith.constant 0 : i32
    %c0_i32_1 = arith.constant 0 : i32
    return %c0_i32, %c0_i32_0 : i32, i32
  }
  func.func @transform_3(%arg0: i32, %arg1: i32, %arg2: i32) -> (i32, i32, i32) {
    %c0_i32 = arith.constant 0 : i32
    %c0_i32_0 = arith.constant 0 : i32
    return %arg0, %c0_i32, %arg1 : i32, i32, i32
  }
}

</mosaic_0001>

<llo_original>
// kernel: single_conv3d_block.1
$region0: #{single_conv3d_block.1}
  #allocation0 [shape = 'u32[]', space=smem, size = 0x4, offset = 0x4, fixed_abs, tag = 'smem constant byte address 0x4 - core index']
  #allocation1 [shape = 'u32[144,128]{1,0:T(1,128)}', space=vmem, size = 0x12000, scoped, tag = 'internal scratch']
  #allocation2 [shape = 'f32[512,128]{1,0:T(8,128)}', space=vmem, size = 0x40000, scoped, tag = 'scratch operand']
  %s0 = inlined_call_operand.vmem [shape: f32[2,512,108], index: 0, kind: input, shape index: {}]
  %s1 = inlined_call_operand.vmem [shape: f32[108,128], index: 1, kind: input, shape index: {}]
  %s2 = inlined_call_operand.vmem [shape: f32[8,1], index: 2, kind: input, shape index: {}]
  %s3 = inlined_call_operand.vmem [shape: f32[2,8,512], index: 3, kind: output, shape index: {}]
  %s4 = sld [smem:[#allocation0]]
  $region53: #{single_conv3d_block.1} parent=0
    _
  %s6 = ssub.s32 1, %s4
  %s7 = scalar_select 0, %s6, %s4
  loop: start=0, step=1, limit=4
  $region2: #{single_conv3d_block.1} parent=0 // loop_pre_header
    _
  $region3: #{single_conv3d_block.1} parent=0 // loop_header
    %s9 = sphi 0, %s13
    %p10 = scmp.ge.s32.totalorder %s9, 4
    %s16 = sphi 0, %s35
    %s17 = sphi 0, %s31
    %s18 = sphi 0, %s27
    %s19 = sphi 0, %s16
    %s20 = sphi 0, %s17
    %s21 = sphi 0, %s18
    %s22 = sphi 0, %s19
    %s23 = sphi 0, %s20
    %s24 = sphi 0, %s21
    %s42 = sphi 0, %s44
    %s45 = sphi 0, %s42
    %s46 = sphi 0, %s45
    %s62 = sphi 0, %s46
    %s68 = sphi 0, %s70
    %s71 = sphi 0, %s68
    %s72 = sphi 0, %s71
    %s88 = sphi 0, %s72
    %s92 = sphi 0, %s92
    %s94 = sphi 0, %s92
    %s95 = sphi 0, %s94
    %s109 = sphi 0, %s95
    %s117 = sphi 0, %s119
    %s120 = sphi 0, %s117
    %s121 = sphi 0, %s120
    %s137 = sphi 0, %s121
  $region4: #{single_conv3d_block.1} parent=0 // loop_header_branch
    %12 = sbr.rel (%p10) target = $region8
  $region5: #{single_conv3d_block.1} parent=0 // loop_body
    %s14 = ssub.s32 %s9, 1
    %s15 = ssub.s32 %s9, 2
    %s25 = sadd.s32 1, %s18
    %p26 = scmp.ge.s32.totalorder %s25, 1
    %s27 = scalar_select %p26, 0, %s25
    %s28 = sadd.s32 1, %s17
    %s29 = scalar_select %p26, %s28, %s17
    %p30 = scmp.ge.s32.totalorder %s29, 1
    %s31 = scalar_select %p30, 0, %s29
    %s32 = sadd.s32 1, %s16
    %s33 = scalar_select %p30, %s32, %s16
    %p34 = scmp.ge.s32.totalorder %s33, 2
    %s35 = scalar_select %p34, 0, %s33
    %s36 = ssub.s32 %s16, %s35
    %s37 = ssub.s32 %s17, %s31
    %s38 = sor.u32 %s36, %s37
    %s39 = ssub.s32 %s18, %s27
    %s40 = sor.u32 %s38, %s39
    %p41 = scmp.eq.s32.totalorder %s40, 0
    %s43 = sadd.s32 %s42, 1
    %s44 = scalar_select %p41, %s42, %s43
    %p47 = pneg %p41
    %p48 = scmp.eq.s32.totalorder %s9, 1
    %p49 = por %p47, %p48
    %p50 = scmp.ne.s32.totalorder %s42, %s45
    %p51 = scmp.eq.s32.totalorder %s9, 0
    %p52 = por %p50, %p51
    %p53 = scmp.ne.s32.totalorder %s42, %s45
    %p54 = scmp.eq.s32.totalorder %s14, 1
    %p55 = por %p53, %p54
    %p56 = scmp.ne.s32.totalorder %s45, %s46
    %p57 = scmp.eq.s32.totalorder %s14, 0
    %p58 = por %p56, %p57
    %p59 = scmp.ne.s32.totalorder %s45, %s46
    %p60 = scmp.eq.s32.totalorder %s15, 1
    %p61 = por %p59, %p60
    %p63 = scmp.ne.s32.totalorder %s46, %s62
    %p64 = scmp.eq.s32.totalorder %s15, 0
    %p65 = por %p63, %p64
    %s66 = ssub.s32 %s18, %s27
    %p67 = scmp.eq.s32.totalorder %s66, 0
    %s69 = sadd.s32 %s68, 1
    %s70 = scalar_select %p67, %s68, %s69
    %p73 = pneg %p67
    %p74 = scmp.eq.s32.totalorder %s9, 1
    %p75 = por %p73, %p74
    %p76 = scmp.ne.s32.totalorder %s68, %s71
    %p77 = scmp.eq.s32.totalorder %s9, 0
    %p78 = por %p76, %p77
    %p79 = scmp.ne.s32.totalorder %s68, %s71
    %p80 = scmp.eq.s32.totalorder %s14, 1
    %p81 = por %p79, %p80
    %p82 = scmp.ne.s32.totalorder %s71, %s72
    %p83 = scmp.eq.s32.totalorder %s14, 0
    %p84 = por %p82, %p83
    %p85 = scmp.ne.s32.totalorder %s71, %s72
    %p86 = scmp.eq.s32.totalorder %s15, 1
    %p87 = por %p85, %p86
    %p89 = scmp.ne.s32.totalorder %s72, %s88
    %p90 = scmp.eq.s32.totalorder %s15, 0
    %p91 = por %p89, %p90
    %s93 = sadd.s32 %s92, 1
    %p96 = scmp.eq.s32.totalorder %s9, 1
    %p97 = scmp.ne.s32.totalorder %s92, %s94
    %p98 = scmp.eq.s32.totalorder %s9, 0
    %p99 = por %p97, %p98
    %p100 = scmp.ne.s32.totalorder %s92, %s94
    %p101 = scmp.eq.s32.totalorder %s14, 1
    %p102 = por %p100, %p101
    %p103 = scmp.ne.s32.totalorder %s94, %s95
    %p104 = scmp.eq.s32.totalorder %s14, 0
    %p105 = por %p103, %p104
    %p106 = scmp.ne.s32.totalorder %s94, %s95
    %p107 = scmp.eq.s32.totalorder %s15, 1
    %p108 = por %p106, %p107
    %p110 = scmp.ne.s32.totalorder %s95, %s109
    %p111 = scmp.eq.s32.totalorder %s15, 0
    %p112 = por %p110, %p111
    %s113 = ssub.s32 %s16, %s35
    %s114 = ssub.s32 %s17, %s31
    %s115 = sor.u32 %s113, %s114
    %p116 = scmp.eq.s32.totalorder %s115, 0
    %s118 = sadd.s32 %s117, 1
    %s119 = scalar_select %p116, %s117, %s118
    %p122 = pneg %p116
    %p123 = scmp.eq.s32.totalorder %s9, 1
    %p124 = por %p122, %p123
    %p125 = scmp.ne.s32.totalorder %s117, %s120
    %p126 = scmp.eq.s32.totalorder %s9, 0
    %p127 = por %p125, %p126
    %p128 = scmp.ne.s32.totalorder %s117, %s120
    %p129 = scmp.eq.s32.totalorder %s14, 1
    %p130 = por %p128, %p129
    %p131 = scmp.ne.s32.totalorder %s120, %s121
    %p132 = scmp.eq.s32.totalorder %s14, 0
    %p133 = por %p131, %p132
    %p134 = scmp.ne.s32.totalorder %s120, %s121
    %p135 = scmp.eq.s32.totalorder %s15, 1
    %p136 = por %p134, %p135
    %p138 = scmp.ne.s32.totalorder %s121, %s137
    %p139 = scmp.eq.s32.totalorder %s15, 0
    %p140 = por %p138, %p139
    %p141 = scmp.le.s32.totalorder 1, %s9
    %p142 = scmp.lt.s32.totalorder %s9, 3
    %p143 = pnand %p141, %p142
    %p144 = pneg %p143
    // Predicated region
    $region9: #{single_conv3d_block.1} parent=5 // pred_check
      _
    $region10: #{single_conv3d_block.1} parent=5 // pred_check_branch
      %146 = sbr.rel (%p143) target = $region12
    $region11: #{single_conv3d_block.1} parent=5 // pred_region
      %s147 = ssub.s32 %s9, 1
      // Predicated region
      $region13: #{single_conv3d_block.1} parent=11 // pred_check
        %p148 = pneg %p84
      $region14: #{single_conv3d_block.1} parent=11 // pred_check_branch
        %150 = sbr.rel (%p148) target = $region16
      $region15: #{single_conv3d_block.1} parent=11 // pred_region
        %s151 = smul.u32 14, %s21
        %p152 = scmp.lt.s32.totalorder %s151, 13
        %s153 = scalar_select %p152, %s151, 13
        %s154 = smul.addr %s153, 8
        %s155 = scalar_lea.vmem %s1, %s154
        %s156 = smul.u32 14, %s21
      $region16: #{single_conv3d_block.1} parent=11 // pred_fallthru
        _
      // Predicated region
      $region17: #{single_conv3d_block.1} parent=11 // pred_check
        %p157 = pneg %p105
      $region18: #{single_conv3d_block.1} parent=11 // pred_check_branch
        %159 = sbr.rel (%p157) target = $region20
      $region19: #{single_conv3d_block.1} parent=11 // pred_region
        _
      $region20: #{single_conv3d_block.1} parent=11 // pred_fallthru
        _
    $region12: #{single_conv3d_block.1} parent=5 // pred_fallthru
      _
    %p160 = scmp.lt.s32.totalorder %s9, 2
    // Predicated region
    $region21: #{single_conv3d_block.1} parent=5 // pred_check
      %p161 = pneg %p160
    $region22: #{single_conv3d_block.1} parent=5 // pred_check_branch
      %163 = sbr.rel (%p161) target = $region24
    $region23: #{single_conv3d_block.1} parent=5 // pred_region
      // Predicated region
      $region25: #{single_conv3d_block.1} parent=23 // pred_check
        %p164 = pneg %p52
      $region26: #{single_conv3d_block.1} parent=23 // pred_check_branch
        %166 = sbr.rel (%p164) target = $region28
      $region27: #{single_conv3d_block.1} parent=23 // pred_region
        %s167 = smul.u32 64, %s17
        %p168 = scmp.lt.s32.totalorder %s16, 1
        %s169 = scalar_select %p168, %s16, 1
        %p170 = scmp.lt.s32.totalorder %s167, 63
        %s171 = scalar_select %p170, %s167, 63
        %p172 = scmp.lt.s32.totalorder %s18, 0
        %s173 = scalar_select %p172, %s18, 0
        %s174 = sadd.s32 %s173, %s171
        %s175 = smul.addr %s169, 64
        %s176 = sadd.s32 %s174, %s175
        %s177 = smul.addr %s176, 8
        %s178 = scalar_lea.vmem %s0, %s177
        %s179 = smul.u32 64, %s17
      $region28: #{single_conv3d_block.1} parent=23 // pred_fallthru
        _
    $region24: #{single_conv3d_block.1} parent=5 // pred_fallthru
      _
    %p180 = scmp.le.s32.totalorder 1, %s9
    %p181 = scmp.lt.s32.totalorder %s9, 3
    %p182 = pnand %p180, %p181
    %p183 = pneg %p182
    // Predicated region
    $region29: #{single_conv3d_block.1} parent=5 // pred_check
      _
    $region30: #{single_conv3d_block.1} parent=5 // pred_check_branch
      %185 = sbr.rel (%p182) target = $region32
    $region31: #{single_conv3d_block.1} parent=5 // pred_region
      %s186 = ssub.s32 %s9, 1
      %s187 = smul.u32 64, %s20
      %p188 = scmp.lt.s32.totalorder %s19, 1
      %s189 = scalar_select %p188, %s19, 1
      %p190 = scmp.lt.s32.totalorder %s187, 63
      %s191 = scalar_select %p190, %s187, 63
      %p192 = scmp.lt.s32.totalorder %s21, 0
      %s193 = scalar_select %p192, %s21, 0
      %s194 = sadd.s32 %s193, %s191
      %s195 = smul.addr %s189, 64
      %s196 = sadd.s32 %s194, %s195
      %s197 = smul.addr %s196, 8
      %s198 = scalar_lea.vmem %s0, %s197
      %p199 = pneg %p58
      %p200 = pneg %p55
      %s201 = smul.u32 14, %s21
      %p202 = scmp.lt.s32.totalorder %s201, 13
      %s203 = scalar_select %p202, %s201, 13
      %s204 = smul.addr %s203, 8
      %s205 = scalar_lea.vmem %s1, %s204
      %p206 = pneg %p84
      %p207 = pneg %p81
      %p208 = pneg %p105
      %p209 = pneg %p102
      %p210 = pneg %p133
      %p211 = pneg %p130
      %s212 = smul.u32 4, %s20
      %p213 = scmp.lt.s32.totalorder %s19, 1
      %s214 = scalar_select %p213, %s19, 1
      %p215 = scmp.lt.s32.totalorder %s212, 3
      %s216 = scalar_select %p215, %s212, 3
      %s217 = smul.addr %s214, 4
      %s218 = sadd.s32 %s216, %s217
      %s219 = smul.addr %s218, 8
      %s220 = scalar_lea.vmem %s3, %s219
      %s221 = smul.u32 64, %s20
      %p222 = scmp.lt.s32.totalorder %s19, 1
      %s223 = scalar_select %p222, %s19, 1
      %p224 = scmp.lt.s32.totalorder %s221, 63
      %s225 = scalar_select %p224, %s221, 63
      %p226 = scmp.lt.s32.totalorder %s21, 0
      %s227 = scalar_select %p226, %s21, 0
      %s228 = sadd.s32 %s227, %s225
      %s229 = smul.addr %s223, 64
      %s230 = sadd.s32 %s228, %s229
      %s231 = smul.addr %s230, 8
      %s232 = scalar_lea.vmem %s0, %s231
      %s233 = smul.u32 64, %s20
      %s234 = smul.u32 14, %s21
      %p235 = scmp.lt.s32.totalorder %s234, 13
      %s236 = scalar_select %p235, %s234, 13
      %s237 = smul.addr %s236, 8
      %s238 = scalar_lea.vmem %s1, %s237
      %s239 = smul.u32 14, %s21
      %s240 = smul.u32 4, %s20
      %p241 = scmp.lt.s32.totalorder %s19, 1
      %s242 = scalar_select %p241, %s19, 1
      %p243 = scmp.lt.s32.totalorder %s240, 3
      %s244 = scalar_select %p243, %s240, 3
      %s245 = smul.addr %s242, 4
      %s246 = sadd.s32 %s244, %s245
      %s247 = smul.addr %s246, 8
      %s248 = scalar_lea.vmem %s3, %s247
      %s249 = smul.u32 4, %s20
      %p250 = scmp.eq.s32.totalorder %s21, 0
      // Predicated region
      $region33: #{single_conv3d_block.1} parent=31 // pred_check
        %p251 = pneg %p250
      $region34: #{single_conv3d_block.1} parent=31 // pred_check_branch
        %253 = sbr.rel (%p251) target = $region36
      $region35: #{single_conv3d_block.1} parent=31 // pred_region
        %254 = vst [vmem:[#allocation2] sm:$0xff] 0.0
        %255 = vst [vmem:[#allocation2 + $0x8] sm:$0xff] 0.0
        %256 = vst [vmem:[#allocation2 + $0x10] sm:$0xff] 0.0
        %257 = vst [vmem:[#allocation2 + $0x18] sm:$0xff] 0.0
        %258 = vst [vmem:[#allocation2 + $0x20] sm:$0xff] 0.0
        %259 = vst [vmem:[#allocation2 + $0x28] sm:$0xff] 0.0
        %260 = vst [vmem:[#allocation2 + $0x30] sm:$0xff] 0.0
        %261 = vst [vmem:[#allocation2 + $0x38] sm:$0xff] 0.0
        %262 = vst [vmem:[#allocation2 + $0x40] sm:$0xff] 0.0
        %263 = vst [vmem:[#allocation2 + $0x48] sm:$0xff] 0.0
        %264 = vst [vmem:[#allocation2 + $0x50] sm:$0xff] 0.0
        %265 = vst [vmem:[#allocation2 + $0x58] sm:$0xff] 0.0
        %266 = vst [vmem:[#allocation2 + $0x60] sm:$0xff] 0.0
        %267 = vst [vmem:[#allocation2 + $0x68] sm:$0xff] 0.0
        %268 = vst [vmem:[#allocation2 + $0x70] sm:$0xff] 0.0
        %269 = vst [vmem:[#allocation2 + $0x78] sm:$0xff] 0.0
        %270 = vst [vmem:[#allocation2 + $0x80] sm:$0xff] 0.0
        %271 = vst [vmem:[#allocation2 + $0x88] sm:$0xff] 0.0
        %272 = vst [vmem:[#allocation2 + $0x90] sm:$0xff] 0.0
        %273 = vst [vmem:[#allocation2 + $0x98] sm:$0xff] 0.0
        %274 = vst [vmem:[#allocation2 + $0xa0] sm:$0xff] 0.0
        %275 = vst [vmem:[#allocation2 + $0xa8] sm:$0xff] 0.0
        %276 = vst [vmem:[#allocation2 + $0xb0] sm:$0xff] 0.0
        %277 = vst [vmem:[#allocation2 + $0xb8] sm:$0xff] 0.0
        %278 = vst [vmem:[#allocation2 + $0xc0] sm:$0xff] 0.0
        %279 = vst [vmem:[#allocation2 + $0xc8] sm:$0xff] 0.0
        %280 = vst [vmem:[#allocation2 + $0xd0] sm:$0xff] 0.0
        %281 = vst [vmem:[#allocation2 + $0xd8] sm:$0xff] 0.0
        %282 = vst [vmem:[#allocation2 + $0xe0] sm:$0xff] 0.0
        %283 = vst [vmem:[#allocation2 + $0xe8] sm:$0xff] 0.0
        %284 = vst [vmem:[#allocation2 + $0xf0] sm:$0xff] 0.0
        %285 = vst [vmem:[#allocation2 + $0xf8] sm:$0xff] 0.0
        %286 = vst [vmem:[#allocation2 + $0x100] sm:$0xff] 0.0
        %287 = vst [vmem:[#allocation2 + $0x108] sm:$0xff] 0.0
        %288 = vst [vmem:[#allocation2 + $0x110] sm:$0xff] 0.0
        %289 = vst [vmem:[#allocation2 + $0x118] sm:$0xff] 0.0
        %290 = vst [vmem:[#allocation2 + $0x120] sm:$0xff] 0.0
        %291 = vst [vmem:[#allocation2 + $0x128] sm:$0xff] 0.0
        %292 = vst [vmem:[#allocation2 + $0x130] sm:$0xff] 0.0
        %293 = vst [vmem:[#allocation2 + $0x138] sm:$0xff] 0.0
        %294 = vst [vmem:[#allocation2 + $0x140] sm:$0xff] 0.0
        %295 = vst [vmem:[#allocation2 + $0x148] sm:$0xff] 0.0
        %296 = vst [vmem:[#allocation2 + $0x150] sm:$0xff] 0.0
        %297 = vst [vmem:[#allocation2 + $0x158] sm:$0xff] 0.0
        %298 = vst [vmem:[#allocation2 + $0x160] sm:$0xff] 0.0
        %299 = vst [vmem:[#allocation2 + $0x168] sm:$0xff] 0.0
        %300 = vst [vmem:[#allocation2 + $0x170] sm:$0xff] 0.0
        %301 = vst [vmem:[#allocation2 + $0x178] sm:$0xff] 0.0
        %302 = vst [vmem:[#allocation2 + $0x180] sm:$0xff] 0.0
        %303 = vst [vmem:[#allocation2 + $0x188] sm:$0xff] 0.0
        %304 = vst [vmem:[#allocation2 + $0x190] sm:$0xff] 0.0
        %305 = vst [vmem:[#allocation2 + $0x198] sm:$0xff] 0.0
        %306 = vst [vmem:[#allocation2 + $0x1a0] sm:$0xff] 0.0
        %307 = vst [vmem:[#allocation2 + $0x1a8] sm:$0xff] 0.0
        %308 = vst [vmem:[#allocation2 + $0x1b0] sm:$0xff] 0.0
        %309 = vst [vmem:[#allocation2 + $0x1b8] sm:$0xff] 0.0
        %310 = vst [vmem:[#allocation2 + $0x1c0] sm:$0xff] 0.0
        %311 = vst [vmem:[#allocation2 + $0x1c8] sm:$0xff] 0.0
        %312 = vst [vmem:[#allocation2 + $0x1d0] sm:$0xff] 0.0
        %313 = vst [vmem:[#allocation2 + $0x1d8] sm:$0xff] 0.0
        %314 = vst [vmem:[#allocation2 + $0x1e0] sm:$0xff] 0.0
        %315 = vst [vmem:[#allocation2 + $0x1e8] sm:$0xff] 0.0
        %316 = vst [vmem:[#allocation2 + $0x1f0] sm:$0xff] 0.0
        %317 = vst [vmem:[#allocation2 + $0x1f8] sm:$0xff] 0.0
      $region36: #{single_conv3d_block.1} parent=31 // pred_fallthru
        _
      %v318 = vld [vmem:[#allocation2] sm:$0xff]
      %v319 = vld [vmem:[#allocation2 + $0x8] sm:$0xff]
      %v320 = vld [vmem:[#allocation2 + $0x10] sm:$0xff]
      %v321 = vld [vmem:[#allocation2 + $0x18] sm:$0xff]
      %v322 = vld [vmem:[#allocation2 + $0x20] sm:$0xff]
      %v323 = vld [vmem:[#allocation2 + $0x28] sm:$0xff]
      %v324 = vld [vmem:[#allocation2 + $0x30] sm:$0xff]
      %v325 = vld [vmem:[#allocation2 + $0x38] sm:$0xff]
      %v326 = vld [vmem:[#allocation2 + $0x40] sm:$0xff]
      %v327 = vld [vmem:[#allocation2 + $0x48] sm:$0xff]
      %v328 = vld [vmem:[#allocation2 + $0x50] sm:$0xff]
      %v329 = vld [vmem:[#allocation2 + $0x58] sm:$0xff]
      %v330 = vld [vmem:[#allocation2 + $0x60] sm:$0xff]
      %v331 = vld [vmem:[#allocation2 + $0x68] sm:$0xff]
      %v332 = vld [vmem:[#allocation2 + $0x70] sm:$0xff]
      %v333 = vld [vmem:[#allocation2 + $0x78] sm:$0xff]
      %v334 = vld [vmem:[#allocation2 + $0x80] sm:$0xff]
      %v335 = vld [vmem:[#allocation2 + $0x88] sm:$0xff]
      %v336 = vld [vmem:[#allocation2 + $0x90] sm:$0xff]
      %v337 = vld [vmem:[#allocation2 + $0x98] sm:$0xff]
      %v338 = vld [vmem:[#allocation2 + $0xa0] sm:$0xff]
      %v339 = vld [vmem:[#allocation2 + $0xa8] sm:$0xff]
      %v340 = vld [vmem:[#allocation2 + $0xb0] sm:$0xff]
      %v341 = vld [vmem:[#allocation2 + $0xb8] sm:$0xff]
      %v342 = vld [vmem:[#allocation2 + $0xc0] sm:$0xff]
      %v343 = vld [vmem:[#allocation2 + $0xc8] sm:$0xff]
      %v344 = vld [vmem:[#allocation2 + $0xd0] sm:$0xff]
      %v345 = vld [vmem:[#allocation2 + $0xd8] sm:$0xff]
      %v346 = vld [vmem:[#allocation2 + $0xe0] sm:$0xff]
      %v347 = vld [vmem:[#allocation2 + $0xe8] sm:$0xff]
      %v348 = vld [vmem:[#allocation2 + $0xf0] sm:$0xff]
      %v349 = vld [vmem:[#allocation2 + $0xf8] sm:$0xff]
      %v350 = vld [vmem:[#allocation2 + $0x100] sm:$0xff]
      %v351 = vld [vmem:[#allocation2 + $0x108] sm:$0xff]
      %v352 = vld [vmem:[#allocation2 + $0x110] sm:$0xff]
      %v353 = vld [vmem:[#allocation2 + $0x118] sm:$0xff]
      %v354 = vld [vmem:[#allocation2 + $0x120] sm:$0xff]
      %v355 = vld [vmem:[#allocation2 + $0x128] sm:$0xff]
      %v356 = vld [vmem:[#allocation2 + $0x130] sm:$0xff]
      %v357 = vld [vmem:[#allocation2 + $0x138] sm:$0xff]
      %v358 = vld [vmem:[#allocation2 + $0x140] sm:$0xff]
      %v359 = vld [vmem:[#allocation2 + $0x148] sm:$0xff]
      %v360 = vld [vmem:[#allocation2 + $0x150] sm:$0xff]
      %v361 = vld [vmem:[#allocation2 + $0x158] sm:$0xff]
      %v362 = vld [vmem:[#allocation2 + $0x160] sm:$0xff]
      %v363 = vld [vmem:[#allocation2 + $0x168] sm:$0xff]
      %v364 = vld [vmem:[#allocation2 + $0x170] sm:$0xff]
      %v365 = vld [vmem:[#allocation2 + $0x178] sm:$0xff]
      %v366 = vld [vmem:[#allocation2 + $0x180] sm:$0xff]
      %v367 = vld [vmem:[#allocation2 + $0x188] sm:$0xff]
      %v368 = vld [vmem:[#allocation2 + $0x190] sm:$0xff]
      %v369 = vld [vmem:[#allocation2 + $0x198] sm:$0xff]
      %v370 = vld [vmem:[#allocation2 + $0x1a0] sm:$0xff]
      %v371 = vld [vmem:[#allocation2 + $0x1a8] sm:$0xff]
      %v372 = vld [vmem:[#allocation2 + $0x1b0] sm:$0xff]
      %v373 = vld [vmem:[#allocation2 + $0x1b8] sm:$0xff]
      %v374 = vld [vmem:[#allocation2 + $0x1c0] sm:$0xff]
      %v375 = vld [vmem:[#allocation2 + $0x1c8] sm:$0xff]
      %v376 = vld [vmem:[#allocation2 + $0x1d0] sm:$0xff]
      %v377 = vld [vmem:[#allocation2 + $0x1d8] sm:$0xff]
      %v378 = vld [vmem:[#allocation2 + $0x1e0] sm:$0xff]
      %v379 = vld [vmem:[#allocation2 + $0x1e8] sm:$0xff]
      %v380 = vld [vmem:[#allocation2 + $0x1f0] sm:$0xff]
      %v381 = vld [vmem:[#allocation2 + $0x1f8] sm:$0xff]
      %v382 = vld [vmem:[%s232] sm:$0xff]
      %v383 = vld [vmem:[%s232 + $0x8] sm:$0xff]
      %v384 = vld [vmem:[%s232 + $0x10] sm:$0xff]
      %v385 = vld [vmem:[%s232 + $0x18] sm:$0xff]
      %v386 = vld [vmem:[%s232 + $0x20] sm:$0xff]
      %v387 = vld [vmem:[%s232 + $0x28] sm:$0xff]
      %v388 = vld [vmem:[%s232 + $0x30] sm:$0xff]
      %v389 = vld [vmem:[%s232 + $0x38] sm:$0xff]
      %v390 = vld [vmem:[%s232 + $0x40] sm:$0xff]
      %v391 = vld [vmem:[%s232 + $0x48] sm:$0xff]
      %v392 = vld [vmem:[%s232 + $0x50] sm:$0xff]
      %v393 = vld [vmem:[%s232 + $0x58] sm:$0xff]
      %v394 = vld [vmem:[%s232 + $0x60] sm:$0xff]
      %v395 = vld [vmem:[%s232 + $0x68] sm:$0xff]
      %v396 = vld [vmem:[%s232 + $0x70] sm:$0xff]
      %v397 = vld [vmem:[%s232 + $0x78] sm:$0xff]
      %v398 = vld [vmem:[%s232 + $0x80] sm:$0xff]
      %v399 = vld [vmem:[%s232 + $0x88] sm:$0xff]
      %v400 = vld [vmem:[%s232 + $0x90] sm:$0xff]
      %v401 = vld [vmem:[%s232 + $0x98] sm:$0xff]
      %v402 = vld [vmem:[%s232 + $0xa0] sm:$0xff]
      %v403 = vld [vmem:[%s232 + $0xa8] sm:$0xff]
      %v404 = vld [vmem:[%s232 + $0xb0] sm:$0xff]
      %v405 = vld [vmem:[%s232 + $0xb8] sm:$0xff]
      %v406 = vld [vmem:[%s232 + $0xc0] sm:$0xff]
      %v407 = vld [vmem:[%s232 + $0xc8] sm:$0xff]
      %v408 = vld [vmem:[%s232 + $0xd0] sm:$0xff]
      %v409 = vld [vmem:[%s232 + $0xd8] sm:$0xff]
      %v410 = vld [vmem:[%s232 + $0xe0] sm:$0xff]
      %v411 = vld [vmem:[%s232 + $0xe8] sm:$0xff]
      %v412 = vld [vmem:[%s232 + $0xf0] sm:$0xff]
      %v413 = vld [vmem:[%s232 + $0xf8] sm:$0xff]
      %v414 = vld [vmem:[%s232 + $0x100] sm:$0xff]
      %v415 = vld [vmem:[%s232 + $0x108] sm:$0xff]
      %v416 = vld [vmem:[%s232 + $0x110] sm:$0xff]
      %v417 = vld [vmem:[%s232 + $0x118] sm:$0xff]
      %v418 = vld [vmem:[%s232 + $0x120] sm:$0xff]
      %v419 = vld [vmem:[%s232 + $0x128] sm:$0xff]
      %v420 = vld [vmem:[%s232 + $0x130] sm:$0xff]
      %v421 = vld [vmem:[%s232 + $0x138] sm:$0xff]
      %v422 = vld [vmem:[%s232 + $0x140] sm:$0xff]
      %v423 = vld [vmem:[%s232 + $0x148] sm:$0xff]
      %v424 = vld [vmem:[%s232 + $0x150] sm:$0xff]
      %v425 = vld [vmem:[%s232 + $0x158] sm:$0xff]
      %v426 = vld [vmem:[%s232 + $0x160] sm:$0xff]
      %v427 = vld [vmem:[%s232 + $0x168] sm:$0xff]
      %v428 = vld [vmem:[%s232 + $0x170] sm:$0xff]
      %v429 = vld [vmem:[%s232 + $0x178] sm:$0xff]
      %v430 = vld [vmem:[%s232 + $0x180] sm:$0xff]
      %v431 = vld [vmem:[%s232 + $0x188] sm:$0xff]
      %v432 = vld [vmem:[%s232 + $0x190] sm:$0xff]
      %v433 = vld [vmem:[%s232 + $0x198] sm:$0xff]
      %v434 = vld [vmem:[%s232 + $0x1a0] sm:$0xff]
      %v435 = vld [vmem:[%s232 + $0x1a8] sm:$0xff]
      %v436 = vld [vmem:[%s232 + $0x1b0] sm:$0xff]
      %v437 = vld [vmem:[%s232 + $0x1b8] sm:$0xff]
      %v438 = vld [vmem:[%s232 + $0x1c0] sm:$0xff]
      %v439 = vld [vmem:[%s232 + $0x1c8] sm:$0xff]
      %v440 = vld [vmem:[%s232 + $0x1d0] sm:$0xff]
      %v441 = vld [vmem:[%s232 + $0x1d8] sm:$0xff]
      %v442 = vld [vmem:[%s232 + $0x1e0] sm:$0xff]
      %v443 = vld [vmem:[%s232 + $0x1e8] sm:$0xff]
      %v444 = vld [vmem:[%s232 + $0x1f0] sm:$0xff]
      %v445 = vld [vmem:[%s232 + $0x1f8] sm:$0xff]
      %v446 = vld [vmem:[%s238] sm:$0xff]
      %v447 = vld [vmem:[%s238 + $0x8] sm:$0xff]
      %v448 = vld [vmem:[%s238 + $0x10] sm:$0xff]
      %v449 = vld [vmem:[%s238 + $0x18] sm:$0xff]
      %v450 = vld [vmem:[%s238 + $0x20] sm:$0xff]
      %v451 = vld [vmem:[%s238 + $0x28] sm:$0xff]
      %v452 = vld [vmem:[%s238 + $0x30] sm:$0xff]
      %v453 = vld [vmem:[%s238 + $0x38] sm:$0xff]
      %v454 = vld [vmem:[%s238 + $0x40] sm:$0xff]
      %v455 = vld [vmem:[%s238 + $0x48] sm:$0xff]
      %v456 = vld [vmem:[%s238 + $0x50] sm:$0xff]
      %v457 = vld [vmem:[%s238 + $0x58] sm:$0xff]
      %v458 = vld [vmem:[%s238 + $0x60] sm:$0xff]
      %v459 = vld [vmem:[%s238 + $0x68] sm:$0xf]
      %vm460 = vcmask 883712
      %v462 = vsel %vm460, %v382, 0
      %v465 = vsel %vm460, %v383, 0
      %v468 = vsel %vm460, %v384, 0
      %v471 = vsel %vm460, %v385, 0
      %v474 = vsel %vm460, %v386, 0
      %v477 = vsel %vm460, %v387, 0
      %v480 = vsel %vm460, %v388, 0
      %v483 = vsel %vm460, %v389, 0
      %v486 = vsel %vm460, %v390, 0
      %v489 = vsel %vm460, %v391, 0
      %v492 = vsel %vm460, %v392, 0
      %v495 = vsel %vm460, %v393, 0
      %v498 = vsel %vm460, %v394, 0
      %v501 = vsel %vm460, %v395, 0
      %v504 = vsel %vm460, %v396, 0
      %v507 = vsel %vm460, %v397, 0
      %v510 = vsel %vm460, %v398, 0
      %v513 = vsel %vm460, %v399, 0
      %v516 = vsel %vm460, %v400, 0
      %v519 = vsel %vm460, %v401, 0
      %v522 = vsel %vm460, %v402, 0
      %v525 = vsel %vm460, %v403, 0
      %v528 = vsel %vm460, %v404, 0
      %v531 = vsel %vm460, %v405, 0
      %v534 = vsel %vm460, %v406, 0
      %v537 = vsel %vm460, %v407, 0
      %v540 = vsel %vm460, %v408, 0
      %v543 = vsel %vm460, %v409, 0
      %v546 = vsel %vm460, %v410, 0
      %v549 = vsel %vm460, %v411, 0
      %v552 = vsel %vm460, %v412, 0
      %v555 = vsel %vm460, %v413, 0
      %v558 = vsel %vm460, %v414, 0
      %v561 = vsel %vm460, %v415, 0
      %v564 = vsel %vm460, %v416, 0
      %v567 = vsel %vm460, %v417, 0
      %v570 = vsel %vm460, %v418, 0
      %v573 = vsel %vm460, %v419, 0
      %v576 = vsel %vm460, %v420, 0
      %v579 = vsel %vm460, %v421, 0
      %v582 = vsel %vm460, %v422, 0
      %v585 = vsel %vm460, %v423, 0
      %v588 = vsel %vm460, %v424, 0
      %v591 = vsel %vm460, %v425, 0
      %v594 = vsel %vm460, %v426, 0
      %v597 = vsel %vm460, %v427, 0
      %v600 = vsel %vm460, %v428, 0
      %v603 = vsel %vm460, %v429, 0
      %v606 = vsel %vm460, %v430, 0
      %v609 = vsel %vm460, %v431, 0
      %v612 = vsel %vm460, %v432, 0
      %v615 = vsel %vm460, %v433, 0
      %v618 = vsel %vm460, %v434, 0
      %v621 = vsel %vm460, %v435, 0
      %v624 = vsel %vm460, %v436, 0
      %v627 = vsel %vm460, %v437, 0
      %v630 = vsel %vm460, %v438, 0
      %v633 = vsel %vm460, %v439, 0
      %v636 = vsel %vm460, %v440, 0
      %v639 = vsel %vm460, %v441, 0
      %v642 = vsel %vm460, %v442, 0
      %v645 = vsel %vm460, %v443, 0
      %v648 = vsel %vm460, %v444, 0
      %v651 = vsel %vm460, %v445, 0
      %vm653 = vcmask 1043456
      %v655 = vsel %vm653, %v459, 0
      %657 = vmatprep.subr.mxu0 0.0
      %658 = vmatpush1.msra.mxu0 %v446
      %659 = vmatprep.subr.mxu0 0.0
      %660 = vmatpush1.msra.mxu0 %v447
      %661 = vmatprep.subr.mxu0 0.0
      %662 = vmatpush1.msra.mxu0 %v448
      %663 = vmatprep.subr.mxu0 0.0
      %664 = vmatpush1.msra.mxu0 %v449
      %665 = vmatprep.subr.mxu0 0.0
      %666 = vmatpush1.msra.mxu0 %v450
      %667 = vmatprep.subr.mxu0 0.0
      %668 = vmatpush1.msra.mxu0 %v451
      %669 = vmatprep.subr.mxu0 0.0
      %670 = vmatpush1.msra.mxu0 %v452
      %671 = vmatprep.subr.mxu0 0.0
      %672 = vmatpush1.msra.mxu0 %v453
      %673 = vmatprep.subr.mxu0 0.0
      %674 = vmatpush1.msra.mxu0 %v454
      %675 = vmatprep.subr.mxu0 0.0
      %676 = vmatpush1.msra.mxu0 %v455
      %677 = vmatprep.subr.mxu0 0.0
      %678 = vmatpush1.msra.mxu0 %v456
      %679 = vmatprep.subr.mxu0 0.0
      %680 = vmatpush1.msra.mxu0 %v457
      %681 = vmatprep.subr.mxu0 0.0
      %682 = vmatpush1.msra.mxu0 %v458
      %683 = vmatprep.subr.mxu0 0.0
      %684 = vmatpush1.msra.mxu0 %v655
      %685 = vmatprep.subr.mxu0 0.0
      %686 = vmatpush1.msra.mxu0 0.0
      %687 = vmatprep.subr.mxu0 0.0
      %688 = vmatpush1.msra.mxu0 0.0
      %689 = vmatprep.subr.mxu0 0.0
      %690 = vmatpush1.msra.mxu0 0.0
      %691 = vmatprep.subr.mxu0 0.0
      %692 = vmatpush1.msra.mxu0 0.0
      %693 = vmatprep.subr.mxu0 0.0
      %694 = vmatpush1.msra.mxu0 0.0
      %695 = vmatprep.subr.mxu0 0.0
      %696 = vmatpush1.msra.mxu0 0.0
      %697 = vmatprep.subr.mxu0 0.0
      %698 = vmatpush1.msra.mxu0 0.0
      %699 = vmatprep.subr.mxu0 0.0
      %700 = vmatpush1.msra.mxu0 0.0
      %701 = vmatprep.subr.mxu0 0.0
      %702 = vmatpush1.msra.mxu0 0.0
      %703 = vmatprep.subr.mxu0 0.0
      %704 = vmatpush1.msra.mxu0 0.0
      %705 = vmatprep.subr.mxu0 0.0
      %706 = vmatpush1.msra.mxu0 0.0
      %707 = vmatprep.subr.mxu0 0.0
      %708 = vmatpush1.msra.mxu0 0.0
      %709 = vmatprep.subr.mxu0 0.0
      %710 = vmatpush1.msra.mxu0 0.0
      %711 = vmatprep.subr.mxu0 0.0
      %712 = vmatpush1.msra.mxu0 0.0
      %713 = vmatprep.subr.mxu0 0.0
      %714 = vmatpush1.msra.mxu0 0.0
      %715 = vmatprep.subr.mxu0 0.0
      %716 = vmatpush1.msra.mxu0 0.0
      %717 = vmatprep.subr.mxu0 0.0
      %718 = vmatpush1.msra.mxu0 0.0
      %719 = vmatprep.subr.mxu0 0.0
      %720 = vmatpush1.msra.mxu0 0.0
      %721 = vmatprep.mubr.f32.mxu0 0.0
      %722 = vmatmul.mubr.f32.gmra.mrb[0].mxu0 %v462
      %v723 = vpop.f32.mrb[0].mxu0
      %v724 = vadd.f32 0.0, %v723
      %v725 = vpop.f32.mrb[0].mxu0
      %726 = vmatprep.mubr.f32.mxu0 0.0
      %727 = vmatmul.mubr.f32.gmra.mrb[0].mxu0 %v465
      %v728 = vpop.f32.mrb[0].mxu0
      %v729 = vadd.f32 0.0, %v728
      %v730 = vpop.f32.mrb[0].mxu0
      %731 = vmatprep.mubr.f32.mxu0 0.0
      %732 = vmatmul.mubr.f32.gmra.mrb[0].mxu0 %v468
      %v733 = vpop.f32.mrb[0].mxu0
      %v734 = vadd.f32 0.0, %v733
      %v735 = vpop.f32.mrb[0].mxu0
      %736 = vmatprep.mubr.f32.mxu0 0.0
      %737 = vmatmul.mubr.f32.gmra.mrb[0].mxu0 %v471
      %v738 = vpop.f32.mrb[0].mxu0
      %v739 = vadd.f32 0.0, %v738
      %v740 = vpop.f32.mrb[0].mxu0
      %741 = vmatprep.mubr.f32.mxu0 0.0
      %742 = vmatmul.mubr.f32.gmra.mrb[0].mxu0 %v474
      %v743 = vpop.f32.mrb[0].mxu0
      %v744 = vadd.f32 0.0, %v743
      %v745 = vpop.f32.mrb[0].mxu0
      %746 = vmatprep.mubr.f32.mxu0 0.0
      %747 = vmatmul.mubr.f32.gmra.mrb[0].mxu0 %v477
      %v748 = vpop.f32.mrb[0].mxu0
      %v749 = vadd.f32 0.0, %v748
      %v750 = vpop.f32.mrb[0].mxu0
      %751 = vmatprep.mubr.f32.mxu0 0.0
      %752 = vmatmul.mubr.f32.gmra.mrb[0].mxu0 %v480
      %v753 = vpop.f32.mrb[0].mxu0
      %v754 = vadd.f32 0.0, %v753
      %v755 = vpop.f32.mrb[0].mxu0
      %756 = vmatprep.mubr.f32.mxu0 0.0
      %757 = vmatmul.mubr.f32.gmra.mrb[0].mxu0 %v483
      %v758 = vpop.f32.mrb[0].mxu0
      %v759 = vadd.f32 0.0, %v758
      %v760 = vpop.f32.mrb[0].mxu0
      %761 = vmatprep.mubr.f32.mxu0 0.0
      %762 = vmatmul.mubr.f32.gmra.mrb[0].mxu0 %v486
      %v763 = vpop.f32.mrb[0].mxu0
      %v764 = vadd.f32 0.0, %v763
      %v765 = vpop.f32.mrb[0].mxu0
      %766 = vmatprep.mubr.f32.mxu0 0.0
      %767 = vmatmul.mubr.f32.gmra.mrb[0].mxu0 %v489
      %v768 = vpop.f32.mrb[0].mxu0
      %v769 = vadd.f32 0.0, %v768
      %v770 = vpop.f32.mrb[0].mxu0
      %771 = vmatprep.mubr.f32.mxu0 0.0
      %772 = vmatmul.mubr.f32.gmra.mrb[0].mxu0 %v492
      %v773 = vpop.f32.mrb[0].mxu0
      %v774 = vadd.f32 0.0, %v773
      %v775 = vpop.f32.mrb[0].mxu0
      %776 = vmatprep.mubr.f32.mxu0 0.0
      %777 = vmatmul.mubr.f32.gmra.mrb[0].mxu0 %v495
      %v778 = vpop.f32.mrb[0].mxu0
      %v779 = vadd.f32 0.0, %v778
      %v780 = vpop.f32.mrb[0].mxu0
      %781 = vmatprep.mubr.f32.mxu0 0.0
      %782 = vmatmul.mubr.f32.gmra.mrb[0].mxu0 %v498
      %v783 = vpop.f32.mrb[0].mxu0
      %v784 = vadd.f32 0.0, %v783
      %v785 = vpop.f32.mrb[0].mxu0
      %786 = vmatprep.mubr.f32.mxu0 0.0
      %787 = vmatmul.mubr.f32.gmra.mrb[0].mxu0 %v501
      %v788 = vpop.f32.mrb[0].mxu0
      %v789 = vadd.f32 0.0, %v788
      %v790 = vpop.f32.mrb[0].mxu0
      %791 = vmatprep.mubr.f32.mxu0 0.0
      %792 = vmatmul.mubr.f32.gmra.mrb[0].mxu0 %v504
      %v793 = vpop.f32.mrb[0].mxu0
      %v794 = vadd.f32 0.0, %v793
      %v795 = vpop.f32.mrb[0].mxu0
      %796 = vmatprep.mubr.f32.mxu0 0.0
      %797 = vmatmul.mubr.f32.gmra.mrb[0].mxu0 %v507
      %v798 = vpop.f32.mrb[0].mxu0
      %v799 = vadd.f32 0.0, %v798
      %v800 = vpop.f32.mrb[0].mxu0
      %801 = vmatprep.mubr.f32.mxu0 0.0
      %802 = vmatmul.mubr.f32.gmra.mrb[0].mxu0 %v510
      %v803 = vpop.f32.mrb[0].mxu0
      %v804 = vadd.f32 0.0, %v803
      %v805 = vpop.f32.mrb[0].mxu0
      %806 = vmatprep.mubr.f32.mxu0 0.0
      %807 = vmatmul.mubr.f32.gmra.mrb[0].mxu0 %v513
      %v808 = vpop.f32.mrb[0].mxu0
      %v809 = vadd.f32 0.0, %v808
      %v810 = vpop.f32.mrb[0].mxu0
      %811 = vmatprep.mubr.f32.mxu0 0.0
      %812 = vmatmul.mubr.f32.gmra.mrb[0].mxu0 %v516
      %v813 = vpop.f32.mrb[0].mxu0
      %v814 = vadd.f32 0.0, %v813
      %v815 = vpop.f32.mrb[0].mxu0
      %816 = vmatprep.mubr.f32.mxu0 0.0
      %817 = vmatmul.mubr.f32.gmra.mrb[0].mxu0 %v519
      %v818 = vpop.f32.mrb[0].mxu0
      %v819 = vadd.f32 0.0, %v818
      %v820 = vpop.f32.mrb[0].mxu0
      %821 = vmatprep.mubr.f32.mxu0 0.0
      %822 = vmatmul.mubr.f32.gmra.mrb[0].mxu0 %v522
      %v823 = vpop.f32.mrb[0].mxu0
      %v824 = vadd.f32 0.0, %v823
      %v825 = vpop.f32.mrb[0].mxu0
      %826 = vmatprep.mubr.f32.mxu0 0.0
      %827 = vmatmul.mubr.f32.gmra.mrb[0].mxu0 %v525
      %v828 = vpop.f32.mrb[0].mxu0
      %v829 = vadd.f32 0.0, %v828
      %v830 = vpop.f32.mrb[0].mxu0
      %831 = vmatprep.mubr.f32.mxu0 0.0
      %832 = vmatmul.mubr.f32.gmra.mrb[0].mxu0 %v528
      %v833 = vpop.f32.mrb[0].mxu0
      %v834 = vadd.f32 0.0, %v833
      %v835 = vpop.f32.mrb[0].mxu0
      %836 = vmatprep.mubr.f32.mxu0 0.0
      %837 = vmatmul.mubr.f32.gmra.mrb[0].mxu0 %v531
      %v838 = vpop.f32.mrb[0].mxu0
      %v839 = vadd.f32 0.0, %v838
      %v840 = vpop.f32.mrb[0].mxu0
      %841 = vmatprep.mubr.f32.mxu0 0.0
      %842 = vmatmul.mubr.f32.gmra.mrb[0].mxu0 %v534
      %v843 = vpop.f32.mrb[0].mxu0
      %v844 = vadd.f32 0.0, %v843
      %v845 = vpop.f32.mrb[0].mxu0
      %846 = vmatprep.mubr.f32.mxu0 0.0
      %847 = vmatmul.mubr.f32.gmra.mrb[0].mxu0 %v537
      %v848 = vpop.f32.mrb[0].mxu0
      %v849 = vadd.f32 0.0, %v848
      %v850 = vpop.f32.mrb[0].mxu0
      %851 = vmatprep.mubr.f32.mxu0 0.0
      %852 = vmatmul.mubr.f32.gmra.mrb[0].mxu0 %v540
      %v853 = vpop.f32.mrb[0].mxu0
      %v854 = vadd.f32 0.0, %v853
      %v855 = vpop.f32.mrb[0].mxu0
      %856 = vmatprep.mubr.f32.mxu0 0.0
      %857 = vmatmul.mubr.f32.gmra.mrb[0].mxu0 %v543
      %v858 = vpop.f32.mrb[0].mxu0
      %v859 = vadd.f32 0.0, %v858
      %v860 = vpop.f32.mrb[0].mxu0
      %861 = vmatprep.mubr.f32.mxu0 0.0
      %862 = vmatmul.mubr.f32.gmra.mrb[0].mxu0 %v546
      %v863 = vpop.f32.mrb[0].mxu0
      %v864 = vadd.f32 0.0, %v863
      %v865 = vpop.f32.mrb[0].mxu0
      %866 = vmatprep.mubr.f32.mxu0 0.0
      %867 = vmatmul.mubr.f32.gmra.mrb[0].mxu0 %v549
      %v868 = vpop.f32.mrb[0].mxu0
      %v869 = vadd.f32 0.0, %v868
      %v870 = vpop.f32.mrb[0].mxu0
      %871 = vmatprep.mubr.f32.mxu0 0.0
      %872 = vmatmul.mubr.f32.gmra.mrb[0].mxu0 %v552
      %v873 = vpop.f32.mrb[0].mxu0
      %v874 = vadd.f32 0.0, %v873
      %v875 = vpop.f32.mrb[0].mxu0
      %876 = vmatprep.mubr.f32.mxu0 0.0
      %877 = vmatmul.mubr.f32.gmra.mrb[0].mxu0 %v555
      %v878 = vpop.f32.mrb[0].mxu0
      %v879 = vadd.f32 0.0, %v878
      %v880 = vpop.f32.mrb[0].mxu0
      %881 = vmatprep.mubr.f32.mxu0 0.0
      %882 = vmatmul.mubr.f32.gmra.mrb[0].mxu0 %v558
      %v883 = vpop.f32.mrb[0].mxu0
      %v884 = vadd.f32 0.0, %v883
      %v885 = vpop.f32.mrb[0].mxu0
      %886 = vmatprep.mubr.f32.mxu0 0.0
      %887 = vmatmul.mubr.f32.gmra.mrb[0].mxu0 %v561
      %v888 = vpop.f32.mrb[0].mxu0
      %v889 = vadd.f32 0.0, %v888
      %v890 = vpop.f32.mrb[0].mxu0
      %891 = vmatprep.mubr.f32.mxu0 0.0
      %892 = vmatmul.mubr.f32.gmra.mrb[0].mxu0 %v564
      %v893 = vpop.f32.mrb[0].mxu0
      %v894 = vadd.f32 0.0, %v893
      %v895 = vpop.f32.mrb[0].mxu0
      %896 = vmatprep.mubr.f32.mxu0 0.0
      %897 = vmatmul.mubr.f32.gmra.mrb[0].mxu0 %v567
      %v898 = vpop.f32.mrb[0].mxu0
      %v899 = vadd.f32 0.0, %v898
      %v900 = vpop.f32.mrb[0].mxu0
      %901 = vmatprep.mubr.f32.mxu0 0.0
      %902 = vmatmul.mubr.f32.gmra.mrb[0].mxu0 %v570
      %v903 = vpop.f32.mrb[0].mxu0
      %v904 = vadd.f32 0.0, %v903
      %v905 = vpop.f32.mrb[0].mxu0
      %906 = vmatprep.mubr.f32.mxu0 0.0
      %907 = vmatmul.mubr.f32.gmra.mrb[0].mxu0 %v573
      %v908 = vpop.f32.mrb[0].mxu0
      %v909 = vadd.f32 0.0, %v908
      %v910 = vpop.f32.mrb[0].mxu0
      %911 = vmatprep.mubr.f32.mxu0 0.0
      %912 = vmatmul.mubr.f32.gmra.mrb[0].mxu0 %v576
      %v913 = vpop.f32.mrb[0].mxu0
      %v914 = vadd.f32 0.0, %v913
      %v915 = vpop.f32.mrb[0].mxu0
      %916 = vmatprep.mubr.f32.mxu0 0.0
      %917 = vmatmul.mubr.f32.gmra.mrb[0].mxu0 %v579
      %v918 = vpop.f32.mrb[0].mxu0
      %v919 = vadd.f32 0.0, %v918
      %v920 = vpop.f32.mrb[0].mxu0
      %921 = vmatprep.mubr.f32.mxu0 0.0
      %922 = vmatmul.mubr.f32.gmra.mrb[0].mxu0 %v582
      %v923 = vpop.f32.mrb[0].mxu0
      %v924 = vadd.f32 0.0, %v923
      %v925 = vpop.f32.mrb[0].mxu0
      %926 = vmatprep.mubr.f32.mxu0 0.0
      %927 = vmatmul.mubr.f32.gmra.mrb[0].mxu0 %v585
      %v928 = vpop.f32.mrb[0].mxu0
      %v929 = vadd.f32 0.0, %v928
      %v930 = vpop.f32.mrb[0].mxu0
      %931 = vmatprep.mubr.f32.mxu0 0.0
      %932 = vmatmul.mubr.f32.gmra.mrb[0].mxu0 %v588
      %v933 = vpop.f32.mrb[0].mxu0
      %v934 = vadd.f32 0.0, %v933
      %v935 = vpop.f32.mrb[0].mxu0
      %936 = vmatprep.mubr.f32.mxu0 0.0
      %937 = vmatmul.mubr.f32.gmra.mrb[0].mxu0 %v591
      %v938 = vpop.f32.mrb[0].mxu0
      %v939 = vadd.f32 0.0, %v938
      %v940 = vpop.f32.mrb[0].mxu0
      %941 = vmatprep.mubr.f32.mxu0 0.0
      %942 = vmatmul.mubr.f32.gmra.mrb[0].mxu0 %v594
      %v943 = vpop.f32.mrb[0].mxu0
      %v944 = vadd.f32 0.0, %v943
      %v945 = vpop.f32.mrb[0].mxu0
      %946 = vmatprep.mubr.f32.mxu0 0.0
      %947 = vmatmul.mubr.f32.gmra.mrb[0].mxu0 %v597
      %v948 = vpop.f32.mrb[0].mxu0
      %v949 = vadd.f32 0.0, %v948
      %v950 = vpop.f32.mrb[0].mxu0
      %951 = vmatprep.mubr.f32.mxu0 0.0
      %952 = vmatmul.mubr.f32.gmra.mrb[0].mxu0 %v600
      %v953 = vpop.f32.mrb[0].mxu0
      %v954 = vadd.f32 0.0, %v953
      %v955 = vpop.f32.mrb[0].mxu0
      %956 = vmatprep.mubr.f32.mxu0 0.0
      %957 = vmatmul.mubr.f32.gmra.mrb[0].mxu0 %v603
      %v958 = vpop.f32.mrb[0].mxu0
      %v959 = vadd.f32 0.0, %v958
      %v960 = vpop.f32.mrb[0].mxu0
      %961 = vmatprep.mubr.f32.mxu0 0.0
      %962 = vmatmul.mubr.f32.gmra.mrb[0].mxu0 %v606
      %v963 = vpop.f32.mrb[0].mxu0
      %v964 = vadd.f32 0.0, %v963
      %v965 = vpop.f32.mrb[0].mxu0
      %966 = vmatprep.mubr.f32.mxu0 0.0
      %967 = vmatmul.mubr.f32.gmra.mrb[0].mxu0 %v609
      %v968 = vpop.f32.mrb[0].mxu0
      %v969 = vadd.f32 0.0, %v968
      %v970 = vpop.f32.mrb[0].mxu0
      %971 = vmatprep.mubr.f32.mxu0 0.0
      %972 = vmatmul.mubr.f32.gmra.mrb[0].mxu0 %v612
      %v973 = vpop.f32.mrb[0].mxu0
      %v974 = vadd.f32 0.0, %v973
      %v975 = vpop.f32.mrb[0].mxu0
      %976 = vmatprep.mubr.f32.mxu0 0.0
      %977 = vmatmul.mubr.f32.gmra.mrb[0].mxu0 %v615
      %v978 = vpop.f32.mrb[0].mxu0
      %v979 = vadd.f32 0.0, %v978
      %v980 = vpop.f32.mrb[0].mxu0
      %981 = vmatprep.mubr.f32.mxu0 0.0
      %982 = vmatmul.mubr.f32.gmra.mrb[0].mxu0 %v618
      %v983 = vpop.f32.mrb[0].mxu0
      %v984 = vadd.f32 0.0, %v983
      %v985 = vpop.f32.mrb[0].mxu0
      %986 = vmatprep.mubr.f32.mxu0 0.0
      %987 = vmatmul.mubr.f32.gmra.mrb[0].mxu0 %v621
      %v988 = vpop.f32.mrb[0].mxu0
      %v989 = vadd.f32 0.0, %v988
      %v990 = vpop.f32.mrb[0].mxu0
      %991 = vmatprep.mubr.f32.mxu0 0.0
      %992 = vmatmul.mubr.f32.gmra.mrb[0].mxu0 %v624
      %v993 = vpop.f32.mrb[0].mxu0
      %v994 = vadd.f32 0.0, %v993
      %v995 = vpop.f32.mrb[0].mxu0
      %996 = vmatprep.mubr.f32.mxu0 0.0
      %997 = vmatmul.mubr.f32.gmra.mrb[0].mxu0 %v627
      %v998 = vpop.f32.mrb[0].mxu0
      %v999 = vadd.f32 0.0, %v998
      %v1000 = vpop.f32.mrb[0].mxu0
      %1001 = vmatprep.mubr.f32.mxu0 0.0
      %1002 = vmatmul.mubr.f32.gmra.mrb[0].mxu0 %v630
      %v1003 = vpop.f32.mrb[0].mxu0
      %v1004 = vadd.f32 0.0, %v1003
      %v1005 = vpop.f32.mrb[0].mxu0
      %1006 = vmatprep.mubr.f32.mxu0 0.0
      %1007 = vmatmul.mubr.f32.gmra.mrb[0].mxu0 %v633
      %v1008 = vpop.f32.mrb[0].mxu0
      %v1009 = vadd.f32 0.0, %v1008
      %v1010 = vpop.f32.mrb[0].mxu0
      %1011 = vmatprep.mubr.f32.mxu0 0.0
      %1012 = vmatmul.mubr.f32.gmra.mrb[0].mxu0 %v636
      %v1013 = vpop.f32.mrb[0].mxu0
      %v1014 = vadd.f32 0.0, %v1013
      %v1015 = vpop.f32.mrb[0].mxu0
      %1016 = vmatprep.mubr.f32.mxu0 0.0
      %1017 = vmatmul.mubr.f32.gmra.mrb[0].mxu0 %v639
      %v1018 = vpop.f32.mrb[0].mxu0
      %v1019 = vadd.f32 0.0, %v1018
      %v1020 = vpop.f32.mrb[0].mxu0
      %1021 = vmatprep.mubr.f32.mxu0 0.0
      %1022 = vmatmul.mubr.f32.gmra.mrb[0].mxu0 %v642
      %v1023 = vpop.f32.mrb[0].mxu0
      %v1024 = vadd.f32 0.0, %v1023
      %v1025 = vpop.f32.mrb[0].mxu0
      %1026 = vmatprep.mubr.f32.mxu0 0.0
      %1027 = vmatmul.mubr.f32.gmra.mrb[0].mxu0 %v645
      %v1028 = vpop.f32.mrb[0].mxu0
      %v1029 = vadd.f32 0.0, %v1028
      %v1030 = vpop.f32.mrb[0].mxu0
      %1031 = vmatprep.mubr.f32.mxu0 0.0
      %1032 = vmatmul.mubr.f32.gmra.mrb[0].mxu0 %v648
      %v1033 = vpop.f32.mrb[0].mxu0
      %v1034 = vadd.f32 0.0, %v1033
      %v1035 = vpop.f32.mrb[0].mxu0
      %1036 = vmatprep.mubr.f32.mxu0 0.0
      %1037 = vmatmul.mubr.f32.gmra.mrb[0].mxu0 %v651
      %v1038 = vpop.f32.mrb[0].mxu0
      %v1039 = vadd.f32 0.0, %v1038
      %v1040 = vpop.f32.mrb[0].mxu0
      %1041 = vdwg.mxu0
      %v1042 = vadd.f32 %v318, %v724
      %v1043 = vadd.f32 %v319, %v729
      %v1044 = vadd.f32 %v320, %v734
      %v1045 = vadd.f32 %v321, %v739
      %v1046 = vadd.f32 %v322, %v744
      %v1047 = vadd.f32 %v323, %v749
      %v1048 = vadd.f32 %v324, %v754
      %v1049 = vadd.f32 %v325, %v759
      %v1050 = vadd.f32 %v326, %v764
      %v1051 = vadd.f32 %v327, %v769
      %v1052 = vadd.f32 %v328, %v774
      %v1053 = vadd.f32 %v329, %v779
      %v1054 = vadd.f32 %v330, %v784
      %v1055 = vadd.f32 %v331, %v789
      %v1056 = vadd.f32 %v332, %v794
      %v1057 = vadd.f32 %v333, %v799
      %v1058 = vadd.f32 %v334, %v804
      %v1059 = vadd.f32 %v335, %v809
      %v1060 = vadd.f32 %v336, %v814
      %v1061 = vadd.f32 %v337, %v819
      %v1062 = vadd.f32 %v338, %v824
      %v1063 = vadd.f32 %v339, %v829
      %v1064 = vadd.f32 %v340, %v834
      %v1065 = vadd.f32 %v341, %v839
      %v1066 = vadd.f32 %v342, %v844
      %v1067 = vadd.f32 %v343, %v849
      %v1068 = vadd.f32 %v344, %v854
      %v1069 = vadd.f32 %v345, %v859
      %v1070 = vadd.f32 %v346, %v864
      %v1071 = vadd.f32 %v347, %v869
      %v1072 = vadd.f32 %v348, %v874
      %v1073 = vadd.f32 %v349, %v879
      %v1074 = vadd.f32 %v350, %v884
      %v1075 = vadd.f32 %v351, %v889
      %v1076 = vadd.f32 %v352, %v894
      %v1077 = vadd.f32 %v353, %v899
      %v1078 = vadd.f32 %v354, %v904
      %v1079 = vadd.f32 %v355, %v909
      %v1080 = vadd.f32 %v356, %v914
      %v1081 = vadd.f32 %v357, %v919
      %v1082 = vadd.f32 %v358, %v924
      %v1083 = vadd.f32 %v359, %v929
      %v1084 = vadd.f32 %v360, %v934
      %v1085 = vadd.f32 %v361, %v939
      %v1086 = vadd.f32 %v362, %v944
      %v1087 = vadd.f32 %v363, %v949
      %v1088 = vadd.f32 %v364, %v954
      %v1089 = vadd.f32 %v365, %v959
      %v1090 = vadd.f32 %v366, %v964
      %v1091 = vadd.f32 %v367, %v969
      %v1092 = vadd.f32 %v368, %v974
      %v1093 = vadd.f32 %v369, %v979
      %v1094 = vadd.f32 %v370, %v984
      %v1095 = vadd.f32 %v371, %v989
      %v1096 = vadd.f32 %v372, %v994
      %v1097 = vadd.f32 %v373, %v999
      %v1098 = vadd.f32 %v374, %v1004
      %v1099 = vadd.f32 %v375, %v1009
      %v1100 = vadd.f32 %v376, %v1014
      %v1101 = vadd.f32 %v377, %v1019
      %v1102 = vadd.f32 %v378, %v1024
      %v1103 = vadd.f32 %v379, %v1029
      %v1104 = vadd.f32 %v380, %v1034
      %v1105 = vadd.f32 %v381, %v1039
      %1106 = vst [vmem:[#allocation2] sm:$0xff] %v1042
      %1107 = vst [vmem:[#allocation2 + $0x8] sm:$0xff] %v1043
      %1108 = vst [vmem:[#allocation2 + $0x10] sm:$0xff] %v1044
      %1109 = vst [vmem:[#allocation2 + $0x18] sm:$0xff] %v1045
      %1110 = vst [vmem:[#allocation2 + $0x20] sm:$0xff] %v1046
      %1111 = vst [vmem:[#allocation2 + $0x28] sm:$0xff] %v1047
      %1112 = vst [vmem:[#allocation2 + $0x30] sm:$0xff] %v1048
      %1113 = vst [vmem:[#allocation2 + $0x38] sm:$0xff] %v1049
      %1114 = vst [vmem:[#allocation2 + $0x40] sm:$0xff] %v1050
      %1115 = vst [vmem:[#allocation2 + $0x48] sm:$0xff] %v1051
      %1116 = vst [vmem:[#allocation2 + $0x50] sm:$0xff] %v1052
      %1117 = vst [vmem:[#allocation2 + $0x58] sm:$0xff] %v1053
      %1118 = vst [vmem:[#allocation2 + $0x60] sm:$0xff] %v1054
      %1119 = vst [vmem:[#allocation2 + $0x68] sm:$0xff] %v1055
      %1120 = vst [vmem:[#allocation2 + $0x70] sm:$0xff] %v1056
      %1121 = vst [vmem:[#allocation2 + $0x78] sm:$0xff] %v1057
      %1122 = vst [vmem:[#allocation2 + $0x80] sm:$0xff] %v1058
      %1123 = vst [vmem:[#allocation2 + $0x88] sm:$0xff] %v1059
      %1124 = vst [vmem:[#allocation2 + $0x90] sm:$0xff] %v1060
      %1125 = vst [vmem:[#allocation2 + $0x98] sm:$0xff] %v1061
      %1126 = vst [vmem:[#allocation2 + $0xa0] sm:$0xff] %v1062
      %1127 = vst [vmem:[#allocation2 + $0xa8] sm:$0xff] %v1063
      %1128 = vst [vmem:[#allocation2 + $0xb0] sm:$0xff] %v1064
      %1129 = vst [vmem:[#allocation2 + $0xb8] sm:$0xff] %v1065
      %1130 = vst [vmem:[#allocation2 + $0xc0] sm:$0xff] %v1066
      %1131 = vst [vmem:[#allocation2 + $0xc8] sm:$0xff] %v1067
      %1132 = vst [vmem:[#allocation2 + $0xd0] sm:$0xff] %v1068
      %1133 = vst [vmem:[#allocation2 + $0xd8] sm:$0xff] %v1069
      %1134 = vst [vmem:[#allocation2 + $0xe0] sm:$0xff] %v1070
      %1135 = vst [vmem:[#allocation2 + $0xe8] sm:$0xff] %v1071
      %1136 = vst [vmem:[#allocation2 + $0xf0] sm:$0xff] %v1072
      %1137 = vst [vmem:[#allocation2 + $0xf8] sm:$0xff] %v1073
      %1138 = vst [vmem:[#allocation2 + $0x100] sm:$0xff] %v1074
      %1139 = vst [vmem:[#allocation2 + $0x108] sm:$0xff] %v1075
      %1140 = vst [vmem:[#allocation2 + $0x110] sm:$0xff] %v1076
      %1141 = vst [vmem:[#allocation2 + $0x118] sm:$0xff] %v1077
      %1142 = vst [vmem:[#allocation2 + $0x120] sm:$0xff] %v1078
      %1143 = vst [vmem:[#allocation2 + $0x128] sm:$0xff] %v1079
      %1144 = vst [vmem:[#allocation2 + $0x130] sm:$0xff] %v1080
      %1145 = vst [vmem:[#allocation2 + $0x138] sm:$0xff] %v1081
      %1146 = vst [vmem:[#allocation2 + $0x140] sm:$0xff] %v1082
      %1147 = vst [vmem:[#allocation2 + $0x148] sm:$0xff] %v1083
      %1148 = vst [vmem:[#allocation2 + $0x150] sm:$0xff] %v1084
      %1149 = vst [vmem:[#allocation2 + $0x158] sm:$0xff] %v1085
      %1150 = vst [vmem:[#allocation2 + $0x160] sm:$0xff] %v1086
      %1151 = vst [vmem:[#allocation2 + $0x168] sm:$0xff] %v1087
      %1152 = vst [vmem:[#allocation2 + $0x170] sm:$0xff] %v1088
      %1153 = vst [vmem:[#allocation2 + $0x178] sm:$0xff] %v1089
      %1154 = vst [vmem:[#allocation2 + $0x180] sm:$0xff] %v1090
      %1155 = vst [vmem:[#allocation2 + $0x188] sm:$0xff] %v1091
      %1156 = vst [vmem:[#allocation2 + $0x190] sm:$0xff] %v1092
      %1157 = vst [vmem:[#allocation2 + $0x198] sm:$0xff] %v1093
      %1158 = vst [vmem:[#allocation2 + $0x1a0] sm:$0xff] %v1094
      %1159 = vst [vmem:[#allocation2 + $0x1a8] sm:$0xff] %v1095
      %1160 = vst [vmem:[#allocation2 + $0x1b0] sm:$0xff] %v1096
      %1161 = vst [vmem:[#allocation2 + $0x1b8] sm:$0xff] %v1097
      %1162 = vst [vmem:[#allocation2 + $0x1c0] sm:$0xff] %v1098
      %1163 = vst [vmem:[#allocation2 + $0x1c8] sm:$0xff] %v1099
      %1164 = vst [vmem:[#allocation2 + $0x1d0] sm:$0xff] %v1100
      %1165 = vst [vmem:[#allocation2 + $0x1d8] sm:$0xff] %v1101
      %1166 = vst [vmem:[#allocation2 + $0x1e0] sm:$0xff] %v1102
      %1167 = vst [vmem:[#allocation2 + $0x1e8] sm:$0xff] %v1103
      %1168 = vst [vmem:[#allocation2 + $0x1f0] sm:$0xff] %v1104
      %1169 = vst [vmem:[#allocation2 + $0x1f8] sm:$0xff] %v1105
      // Predicated region
      $region37: #{single_conv3d_block.1} parent=31 // pred_check
        %p1170 = pneg %p250
      $region38: #{single_conv3d_block.1} parent=31 // pred_check_branch
        %1172 = sbr.rel (%p1170) target = $region40
      $region39: #{single_conv3d_block.1} parent=31 // pred_region
        %v1173 = vld [vmem:[#allocation2] sm:$0xff]
        %v1174 = vld [vmem:[#allocation2 + $0x8] sm:$0xff]
        %v1175 = vld [vmem:[#allocation2 + $0x10] sm:$0xff]
        %v1176 = vld [vmem:[#allocation2 + $0x18] sm:$0xff]
        %v1177 = vld [vmem:[#allocation2 + $0x20] sm:$0xff]
        %v1178 = vld [vmem:[#allocation2 + $0x28] sm:$0xff]
        %v1179 = vld [vmem:[#allocation2 + $0x30] sm:$0xff]
        %v1180 = vld [vmem:[#allocation2 + $0x38] sm:$0xff]
        %v1181 = vld [vmem:[#allocation2 + $0x40] sm:$0xff]
        %v1182 = vld [vmem:[#allocation2 + $0x48] sm:$0xff]
        %v1183 = vld [vmem:[#allocation2 + $0x50] sm:$0xff]
        %v1184 = vld [vmem:[#allocation2 + $0x58] sm:$0xff]
        %v1185 = vld [vmem:[#allocation2 + $0x60] sm:$0xff]
        %v1186 = vld [vmem:[#allocation2 + $0x68] sm:$0xff]
        %v1187 = vld [vmem:[#allocation2 + $0x70] sm:$0xff]
        %v1188 = vld [vmem:[#allocation2 + $0x78] sm:$0xff]
        %v1189 = vld [vmem:[#allocation2 + $0x80] sm:$0xff]
        %v1190 = vld [vmem:[#allocation2 + $0x88] sm:$0xff]
        %v1191 = vld [vmem:[#allocation2 + $0x90] sm:$0xff]
        %v1192 = vld [vmem:[#allocation2 + $0x98] sm:$0xff]
        %v1193 = vld [vmem:[#allocation2 + $0xa0] sm:$0xff]
        %v1194 = vld [vmem:[#allocation2 + $0xa8] sm:$0xff]
        %v1195 = vld [vmem:[#allocation2 + $0xb0] sm:$0xff]
        %v1196 = vld [vmem:[#allocation2 + $0xb8] sm:$0xff]
        %v1197 = vld [vmem:[#allocation2 + $0xc0] sm:$0xff]
        %v1198 = vld [vmem:[#allocation2 + $0xc8] sm:$0xff]
        %v1199 = vld [vmem:[#allocation2 + $0xd0] sm:$0xff]
        %v1200 = vld [vmem:[#allocation2 + $0xd8] sm:$0xff]
        %v1201 = vld [vmem:[#allocation2 + $0xe0] sm:$0xff]
        %v1202 = vld [vmem:[#allocation2 + $0xe8] sm:$0xff]
        %v1203 = vld [vmem:[#allocation2 + $0xf0] sm:$0xff]
        %v1204 = vld [vmem:[#allocation2 + $0xf8] sm:$0xff]
        %v1205 = vld [vmem:[#allocation2 + $0x100] sm:$0xff]
        %v1206 = vld [vmem:[#allocation2 + $0x108] sm:$0xff]
        %v1207 = vld [vmem:[#allocation2 + $0x110] sm:$0xff]
        %v1208 = vld [vmem:[#allocation2 + $0x118] sm:$0xff]
        %v1209 = vld [vmem:[#allocation2 + $0x120] sm:$0xff]
        %v1210 = vld [vmem:[#allocation2 + $0x128] sm:$0xff]
        %v1211 = vld [vmem:[#allocation2 + $0x130] sm:$0xff]
        %v1212 = vld [vmem:[#allocation2 + $0x138] sm:$0xff]
        %v1213 = vld [vmem:[#allocation2 + $0x140] sm:$0xff]
        %v1214 = vld [vmem:[#allocation2 + $0x148] sm:$0xff]
        %v1215 = vld [vmem:[#allocation2 + $0x150] sm:$0xff]
        %v1216 = vld [vmem:[#allocation2 + $0x158] sm:$0xff]
        %v1217 = vld [vmem:[#allocation2 + $0x160] sm:$0xff]
        %v1218 = vld [vmem:[#allocation2 + $0x168] sm:$0xff]
        %v1219 = vld [vmem:[#allocation2 + $0x170] sm:$0xff]
        %v1220 = vld [vmem:[#allocation2 + $0x178] sm:$0xff]
        %v1221 = vld [vmem:[#allocation2 + $0x180] sm:$0xff]
        %v1222 = vld [vmem:[#allocation2 + $0x188] sm:$0xff]
        %v1223 = vld [vmem:[#allocation2 + $0x190] sm:$0xff]
        %v1224 = vld [vmem:[#allocation2 + $0x198] sm:$0xff]
        %v1225 = vld [vmem:[#allocation2 + $0x1a0] sm:$0xff]
        %v1226 = vld [vmem:[#allocation2 + $0x1a8] sm:$0xff]
        %v1227 = vld [vmem:[#allocation2 + $0x1b0] sm:$0xff]
        %v1228 = vld [vmem:[#allocation2 + $0x1b8] sm:$0xff]
        %v1229 = vld [vmem:[#allocation2 + $0x1c0] sm:$0xff]
        %v1230 = vld [vmem:[#allocation2 + $0x1c8] sm:$0xff]
        %v1231 = vld [vmem:[#allocation2 + $0x1d0] sm:$0xff]
        %v1232 = vld [vmem:[#allocation2 + $0x1d8] sm:$0xff]
        %v1233 = vld [vmem:[#allocation2 + $0x1e0] sm:$0xff]
        %v1234 = vld [vmem:[#allocation2 + $0x1e8] sm:$0xff]
        %v1235 = vld [vmem:[#allocation2 + $0x1f0] sm:$0xff]
        %v1236 = vld [vmem:[#allocation2 + $0x1f8] sm:$0xff]
        %1237 = vxpose.xlu0.b32.start [1/16] %v1173, 128
        %1238 = vxpose.xlu0.b32.cont [2/16] %v1174, 128
        %1239 = vxpose.xlu0.b32.cont [3/16] %v1175, 128
        %1240 = vxpose.xlu0.b32.cont [4/16] %v1176, 128
        %1241 = vxpose.xlu0.b32.cont [5/16] %v1177, 128
        %1242 = vxpose.xlu0.b32.cont [6/16] %v1178, 128
        %1243 = vxpose.xlu0.b32.cont [7/16] %v1179, 128
        %1244 = vxpose.xlu0.b32.cont [8/16] %v1180, 128
        %1245 = vxpose.xlu0.b32.cont [9/16] %v1181, 128
        %1246 = vxpose.xlu0.b32.cont [10/16] %v1182, 128
        %1247 = vxpose.xlu0.b32.cont [11/16] %v1183, 128
        %1248 = vxpose.xlu0.b32.cont [12/16] %v1184, 128
        %1249 = vxpose.xlu0.b32.cont [13/16] %v1185, 128
        %1250 = vxpose.xlu0.b32.cont [14/16] %v1186, 128
        %1251 = vxpose.xlu0.b32.cont [15/16] %v1187, 128
        %1252 = vxpose.xlu0.b32.end [16/16] %v1188, 128
        %v1253 = vpop.trf.xlu0
        %v1254 = vpop.trf.xlu0
        %v1255 = vpop.trf.xlu0
        %v1256 = vpop.trf.xlu0
        %v1257 = vpop.trf.xlu0
        %v1258 = vpop.trf.xlu0
        %v1259 = vpop.trf.xlu0
        %v1260 = vpop.trf.xlu0
        %v1261 = vpop.trf.xlu0
        %v1262 = vpop.trf.xlu0
        %v1263 = vpop.trf.xlu0
        %v1264 = vpop.trf.xlu0
        %v1265 = vpop.trf.xlu0
        %v1266 = vpop.trf.xlu0
        %v1267 = vpop.trf.xlu0
        %v1268 = vpop.trf.xlu0
        %1269 = vxpose.xlu0.b32.start [1/16] %v1189, 128
        %1270 = vxpose.xlu0.b32.cont [2/16] %v1190, 128
        %1271 = vxpose.xlu0.b32.cont [3/16] %v1191, 128
        %1272 = vxpose.xlu0.b32.cont [4/16] %v1192, 128
        %1273 = vxpose.xlu0.b32.cont [5/16] %v1193, 128
        %1274 = vxpose.xlu0.b32.cont [6/16] %v1194, 128
        %1275 = vxpose.xlu0.b32.cont [7/16] %v1195, 128
        %1276 = vxpose.xlu0.b32.cont [8/16] %v1196, 128
        %1277 = vxpose.xlu0.b32.cont [9/16] %v1197, 128
        %1278 = vxpose.xlu0.b32.cont [10/16] %v1198, 128
        %1279 = vxpose.xlu0.b32.cont [11/16] %v1199, 128
        %1280 = vxpose.xlu0.b32.cont [12/16] %v1200, 128
        %1281 = vxpose.xlu0.b32.cont [13/16] %v1201, 128
        %1282 = vxpose.xlu0.b32.cont [14/16] %v1202, 128
        %1283 = vxpose.xlu0.b32.cont [15/16] %v1203, 128
        %1284 = vxpose.xlu0.b32.end [16/16] %v1204, 128
        %v1285 = vpop.trf.xlu0
        %v1286 = vpop.trf.xlu0
        %v1287 = vpop.trf.xlu0
        %v1288 = vpop.trf.xlu0
        %v1289 = vpop.trf.xlu0
        %v1290 = vpop.trf.xlu0
        %v1291 = vpop.trf.xlu0
        %v1292 = vpop.trf.xlu0
        %v1293 = vpop.trf.xlu0
        %v1294 = vpop.trf.xlu0
        %v1295 = vpop.trf.xlu0
        %v1296 = vpop.trf.xlu0
        %v1297 = vpop.trf.xlu0
        %v1298 = vpop.trf.xlu0
        %v1299 = vpop.trf.xlu0
        %v1300 = vpop.trf.xlu0
        %1301 = vxpose.xlu0.b32.start [1/16] %v1205, 128
        %1302 = vxpose.xlu0.b32.cont [2/16] %v1206, 128
        %1303 = vxpose.xlu0.b32.cont [3/16] %v1207, 128
        %1304 = vxpose.xlu0.b32.cont [4/16] %v1208, 128
        %1305 = vxpose.xlu0.b32.cont [5/16] %v1209, 128
        %1306 = vxpose.xlu0.b32.cont [6/16] %v1210, 128
        %1307 = vxpose.xlu0.b32.cont [7/16] %v1211, 128
        %1308 = vxpose.xlu0.b32.cont [8/16] %v1212, 128
        %1309 = vxpose.xlu0.b32.cont [9/16] %v1213, 128
        %1310 = vxpose.xlu0.b32.cont [10/16] %v1214, 128
        %1311 = vxpose.xlu0.b32.cont [11/16] %v1215, 128
        %1312 = vxpose.xlu0.b32.cont [12/16] %v1216, 128
        %1313 = vxpose.xlu0.b32.cont [13/16] %v1217, 128
        %1314 = vxpose.xlu0.b32.cont [14/16] %v1218, 128
        %1315 = vxpose.xlu0.b32.cont [15/16] %v1219, 128
        %1316 = vxpose.xlu0.b32.end [16/16] %v1220, 128
        %v1317 = vpop.trf.xlu0
        %v1318 = vpop.trf.xlu0
        %v1319 = vpop.trf.xlu0
        %v1320 = vpop.trf.xlu0
        %v1321 = vpop.trf.xlu0
        %v1322 = vpop.trf.xlu0
        %v1323 = vpop.trf.xlu0
        %v1324 = vpop.trf.xlu0
        %v1325 = vpop.trf.xlu0
        %v1326 = vpop.trf.xlu0
        %v1327 = vpop.trf.xlu0
        %v1328 = vpop.trf.xlu0
        %v1329 = vpop.trf.xlu0
        %v1330 = vpop.trf.xlu0
        %v1331 = vpop.trf.xlu0
        %v1332 = vpop.trf.xlu0
        %1333 = vxpose.xlu0.b32.start [1/16] %v1221, 128
        %1334 = vxpose.xlu0.b32.cont [2/16] %v1222, 128
        %1335 = vxpose.xlu0.b32.cont [3/16] %v1223, 128
        %1336 = vxpose.xlu0.b32.cont [4/16] %v1224, 128
        %1337 = vxpose.xlu0.b32.cont [5/16] %v1225, 128
        %1338 = vxpose.xlu0.b32.cont [6/16] %v1226, 128
        %1339 = vxpose.xlu0.b32.cont [7/16] %v1227, 128
        %1340 = vxpose.xlu0.b32.cont [8/16] %v1228, 128
        %1341 = vxpose.xlu0.b32.cont [9/16] %v1229, 128
        %1342 = vxpose.xlu0.b32.cont [10/16] %v1230, 128
        %1343 = vxpose.xlu0.b32.cont [11/16] %v1231, 128
        %1344 = vxpose.xlu0.b32.cont [12/16] %v1232, 128
        %1345 = vxpose.xlu0.b32.cont [13/16] %v1233, 128
        %1346 = vxpose.xlu0.b32.cont [14/16] %v1234, 128
        %1347 = vxpose.xlu0.b32.cont [15/16] %v1235, 128
        %1348 = vxpose.xlu0.b32.end [16/16] %v1236, 128
        %v1349 = vpop.trf.xlu0
        %v1350 = vpop.trf.xlu0
        %v1351 = vpop.trf.xlu0
        %v1352 = vpop.trf.xlu0
        %v1353 = vpop.trf.xlu0
        %v1354 = vpop.trf.xlu0
        %v1355 = vpop.trf.xlu0
        %v1356 = vpop.trf.xlu0
        %v1357 = vpop.trf.xlu0
        %v1358 = vpop.trf.xlu0
        %v1359 = vpop.trf.xlu0
        %v1360 = vpop.trf.xlu0
        %v1361 = vpop.trf.xlu0
        %v1362 = vpop.trf.xlu0
        %v1363 = vpop.trf.xlu0
        %v1364 = vpop.trf.xlu0
        %v1365 = vld [vmem:[%s2] sm:$0xff]
        %1367 = vset.pattern.permute.xlu0 0
        %1368 = vperm.xlu0 %1367, %v1365
        %v1369 = vpop.permute.xlu0 %1368
        %v1371 = vadd.f32 %v1253, %v1369
        %v1372 = vadd.f32 %v1285, %v1369
        %v1373 = vadd.f32 %v1317, %v1369
        %v1374 = vadd.f32 %v1349, %v1369
        %1375 = vst [vmem:[%s248] sm:$0xff] %v1371
        %1376 = vst [vmem:[%s248 + $0x8] sm:$0xff] %v1372
        %1377 = vst [vmem:[%s248 + $0x10] sm:$0xff] %v1373
        %1378 = vst [vmem:[%s248 + $0x18] sm:$0xff] %v1374
      $region40: #{single_conv3d_block.1} parent=31 // pred_fallthru
        _
      %s1379 = smul.u32 4, %s20
      %p1380 = scmp.lt.s32.totalorder %s19, 1
      %s1381 = scalar_select %p1380, %s19, 1
      %p1382 = scmp.lt.s32.totalorder %s1379, 3
      %s1383 = scalar_select %p1382, %s1379, 3
      %s1384 = smul.addr %s1381, 4
      %s1385 = sadd.s32 %s1383, %s1384
      %s1386 = smul.addr %s1385, 8
      %s1387 = scalar_lea.vmem %s3, %s1386
      // Predicated region
      $region41: #{single_conv3d_block.1} parent=31 // pred_check
        %p1388 = pneg %p130
      $region42: #{single_conv3d_block.1} parent=31 // pred_check_branch
        %1390 = sbr.rel (%p1388) target = $region44
      $region43: #{single_conv3d_block.1} parent=31 // pred_region
        %s1391 = smul.u32 4, %s20
      $region44: #{single_conv3d_block.1} parent=31 // pred_fallthru
        _
    $region32: #{single_conv3d_block.1} parent=5 // pred_fallthru
      _
    %p1392 = scmp.le.s32.totalorder 2, %s9
    // Predicated region
    $region45: #{single_conv3d_block.1} parent=5 // pred_check
      %p1393 = pneg %p1392
    $region46: #{single_conv3d_block.1} parent=5 // pred_check_branch
      %1395 = sbr.rel (%p1393) target = $region48
    $region47: #{single_conv3d_block.1} parent=5 // pred_region
      %s1396 = ssub.s32 %s9, 2
      // Predicated region
      $region49: #{single_conv3d_block.1} parent=47 // pred_check
        %p1397 = pneg %p136
      $region50: #{single_conv3d_block.1} parent=47 // pred_check_branch
        %1399 = sbr.rel (%p1397) target = $region52
      $region51: #{single_conv3d_block.1} parent=47 // pred_region
        %s1400 = smul.u32 4, %s23
        %p1401 = scmp.lt.s32.totalorder %s22, 1
        %s1402 = scalar_select %p1401, %s22, 1
        %p1403 = scmp.lt.s32.totalorder %s1400, 3
        %s1404 = scalar_select %p1403, %s1400, 3
        %s1405 = smul.addr %s1402, 4
        %s1406 = sadd.s32 %s1404, %s1405
        %s1407 = smul.addr %s1406, 8
        %s1408 = scalar_lea.vmem %s3, %s1407
      $region52: #{single_conv3d_block.1} parent=47 // pred_fallthru
        _
    $region48: #{single_conv3d_block.1} parent=5 // pred_fallthru
      _
  $region6: #{single_conv3d_block.1} parent=0 // loop_footer
    %s13 = sadd.s32 1, %s9
  $region7: #{single_conv3d_block.1} parent=0 // loop_footer_branch
    %8 = sbr.rel target = $region3
  $region8: #{single_conv3d_block.1} parent=0 // loop_exit
    _

</llo_original>
